<compile_context>
chip_gen: v6e
topology: v6e:2x2x1
jax: 0.10.0
libtpu: 0.0.40
codegen_flags: <defaults>
</compile_context>

<pallas_src>
import jax
import jax.numpy as jnp
from jax import lax
from jax.experimental import pallas as pl
from jax.experimental.pallas import tpu as pltpu

EPS = 1e-5
LANE = 128
SUBLANE = 8
MATMUL_DTYPE = jnp.bfloat16   # MXU-native on v5e/v6e/v7x; accumulation is f32.


def _round_up(x, m):
    return (x + m - 1) // m * m


# ---------------------------------------------------------------------------
# In-kernel helpers (each grid step handles one batch element: (1, H, W, CP)).
# ---------------------------------------------------------------------------

def _build_padded_and_patch(act_bf16, pad_ref, patch_ref):
    """Write the zero-halo padded buffer and the kw-fused im2col patch.

    act_bf16 : (H, W, CP) bf16 conv input.
    pad_ref  : (1, H+2, Wp, CP) bf16 scratch, Wp >= W+2 (sublane-rounded).
    patch_ref: ((H+2)*W, 3*CP) bf16 scratch with
               patch[(hp, w), kw*CP:(kw+1)*CP] = pad[hp, w+kw, :].
    """
    H, W, CP = act_bf16.shape
    Hp = H + 2
    Wp = pad_ref.shape[2]
    zero_row = jnp.zeros((1, Wp, CP), MATMUL_DTYPE)
    zero_col = jnp.zeros((Hp, 1, CP), MATMUL_DTYPE)
    # Zero only the 1-pixel halo, every step (scratch is not assumed
    # initialized under "parallel" grid semantics).  Columns >= W+2 are
    # sublane-rounding padding and are never read.
    pad_ref[0, 0:1, :, :] = zero_row
    pad_ref[0, Hp - 1:Hp, :, :] = zero_row
    pad_ref[0, :, 0:1, :] = zero_col
    pad_ref[0, :, W + 1:W + 2, :] = zero_col
    pad_ref[0, 1:H + 1, 1:W + 1, :] = act_bf16            # interior
    # kw-fused im2col: 3 activation-sized copies per conv (was 9), reused by
    # all three kh taps in _conv3x3_from_patch.
    for kw in range(3):
        shifted = pad_ref[0, :, kw:kw + W, :]              # (Hp, W, CP)
        patch_ref[:, kw * CP:(kw + 1) * CP] = shifted.reshape(Hp * W, CP)


def _conv3x3_from_patch(patch_ref, w_ref, H, W, CP):
    """3 MXU matmuls with K = 3*CP; kh taps are contiguous row windows."""
    M = H * W
    acc = jnp.zeros((M, CP), jnp.float32)
    for kh in range(3):
        lhs = patch_ref[kh * W:kh * W + M, :]              # (M, 3*CP) bf16
        acc = acc + jnp.dot(lhs, w_ref[kh],
                            preferred_element_type=jnp.float32)
    return acc                                             # (M, CP) f32


def _partial_stats(acc_f32):
    """Per-tile (sum, sum-of-squares) over rows -> (2, CP) f32."""
    s1 = jnp.sum(acc_f32, axis=0, keepdims=True)
    s2 = jnp.sum(acc_f32 * acc_f32, axis=0, keepdims=True)
    rows = lax.broadcasted_iota(jnp.int32, (2, acc_f32.shape[1]), 0)
    return jnp.where(rows == 0, s1, s2)


# ---------------------------------------------------------------------------
# Kernels
# ---------------------------------------------------------------------------

def conv1_stats_kernel(x_ref, w_ref, y_ref, st_ref, pad_scr, patch_scr):
    """Pass A: conv1 on one batch element -> pre-BN output + partial stats."""
    _, H, W, CP = x_ref.shape
    act = x_ref[0].astype(MATMUL_DTYPE)                    # single hoisted cast
    _build_padded_and_patch(act, pad_scr, patch_scr)
    acc = _conv3x3_from_patch(patch_scr, w_ref, H, W, CP)
    y_ref[0] = acc.reshape(H, W, CP)
    st_ref[0] = _partial_stats(acc)


def bn_relu_conv2_stats_kernel(y_ref, scale_ref, shift_ref, w_ref,
                               z_ref, st_ref, pad_scr, patch_scr):
    """Pass B: bn1 (folded scale/shift) + relu + conv2 -> pre-BN out + stats."""
    _, H, W, CP = y_ref.shape
    y = y_ref[0]                                           # (H, W, CP) f32
    act = jnp.maximum(y * scale_ref[...] + shift_ref[...], 0.0)
    act = act.astype(MATMUL_DTYPE)
    _build_padded_and_patch(act, pad_scr, patch_scr)
    acc = _conv3x3_from_patch(patch_scr, w_ref, H, W, CP)
    z_ref[0] = acc.reshape(H, W, CP)
    st_ref[0] = _partial_stats(acc)


def bn_add_relu_kernel(z_ref, scale_ref, shift_ref, x_ref, o_ref):
    """Pass C: bn2 (folded) + residual add + relu (pure elementwise)."""
    z = z_ref[0]
    o_ref[0] = jnp.maximum(z * scale_ref[...] + shift_ref[...] + x_ref[0], 0.0)


# ---------------------------------------------------------------------------
# Wrapper
# ---------------------------------------------------------------------------

def _fold_bn(stats, gamma, beta, count):
    """Fold global batch stats (sum over tiles) into per-channel scale/shift."""
    s1 = jnp.sum(stats[:, 0, :], axis=0)
    s2 = jnp.sum(stats[:, 1, :], axis=0)
    mean = s1 / count
    # Single-pass variance (biased, as PyTorch uses for normalization).
    var = jnp.maximum(s2 / count - mean * mean, 0.0)
    scale = gamma * lax.rsqrt(var + EPS)
    shift = beta - mean * scale
    cp = scale.shape[0]
    return (scale.reshape(1, cp).astype(jnp.float32),
            shift.reshape(1, cp).astype(jnp.float32))


def _conv_scratch(Hp, Wp, W, CP):
    return [pltpu.VMEM((1, Hp, Wp, CP), MATMUL_DTYPE),
            pltpu.VMEM((Hp * W, 3 * CP), MATMUL_DTYPE)]


def basic_block_forward(x, w1, w2, g1, b1, g2, b2):
    """x: (N,H,W,C) f32 NHWC; w1/w2: (3,3,C,C) HWIO; g/b: (C,) BN affine."""
    N, H, W, C = x.shape
    CP = _round_up(C, LANE)
    pc = CP - C
    if pc:
        # TODO(synk): for C < 128 the activation could be lane-padded inside
        # the kernel (masked interior store) to avoid this extra HBM pass; for
        # real ResNet blocks with C a multiple of 128 this branch is dead code.
        x_p = jnp.pad(x, ((0, 0), (0, 0), (0, 0), (0, pc)))
        w1 = jnp.pad(w1, ((0, 0), (0, 0), (0, pc), (0, pc)))
        w2 = jnp.pad(w2, ((0, 0), (0, 0), (0, pc), (0, pc)))
        g1 = jnp.pad(g1, (0, pc)); b1 = jnp.pad(b1, (0, pc))
        g2 = jnp.pad(g2, (0, pc)); b2 = jnp.pad(b2, (0, pc))
    else:
        x_p = x
    x_p = x_p.astype(jnp.float32)
    g1 = g1.astype(jnp.float32); b1 = b1.astype(jnp.float32)
    g2 = g2.astype(jnp.float32); b2 = b2.astype(jnp.float32)
    # (kh, kw, Cin, Cout) -> (kh, kw*Cin, Cout); cast to bf16 once (hoisted).
    w1r = w1.reshape(3, 3 * CP, CP).astype(MATMUL_DTYPE)
    w2r = w2.reshape(3, 3 * CP, CP).astype(MATMUL_DTYPE)

    Hp = H + 2
    Wp = _round_up(W + 2, SUBLANE)        # sublane-aligned padded width
    count = float(N * H * W)

    act_spec = pl.BlockSpec((1, H, W, CP), lambda i: (i, 0, 0, 0))
    w_spec = pl.BlockSpec((3, 3 * CP, CP), lambda i: (0, 0, 0))
    vec_spec = pl.BlockSpec((1, CP), lambda i: (0, 0))
    st_spec = pl.BlockSpec((1, 2, CP), lambda i: (i, 0, 0))

    act_shape = jax.ShapeDtypeStruct((N, H, W, CP), jnp.float32)
    st_shape = jax.ShapeDtypeStruct((N, 2, CP), jnp.float32)

    # VMEM budget from actual buffer sizes (double-buffered blocks + scratch +
    # weights + headroom for in-kernel f32 intermediates), clamped so it is
    # valid on v7x's 64 MiB as well as v5e/v6e's 128 MiB.
    blk_bytes = H * W * CP * 4
    scr_bytes = (Hp * Wp * CP + Hp * W * 3 * CP) * 2
    w_bytes = 2 * (3 * 3 * CP * CP * 2)
    est = 8 * blk_bytes + scr_bytes + w_bytes + (8 << 20)
    vmem_bytes = int(min(64 << 20, max(32 << 20, est)))
    cparams = pltpu.CompilerParams(dimension_semantics=("parallel",),
                                   vmem_limit_bytes=vmem_bytes)

    # Pass A: conv1 + partial BN1 stats.
    y1, st1 = pl.pallas_call(
        conv1_stats_kernel,
        grid=(N,),
        in_specs=[act_spec, w_spec],
        out_specs=(act_spec, st_spec),
        out_shape=(act_shape, st_shape),
        scratch_shapes=_conv_scratch(Hp, Wp, W, CP),
        compiler_params=cparams,
    )(x_p, w1r)

    scale1, shift1 = _fold_bn(st1, g1, b1, count)

    # Pass B: bn1 + relu + conv2 + partial BN2 stats.
    z, st2 = pl.pallas_call(
        bn_relu_conv2_stats_kernel,
        grid=(N,),
        in_specs=[act_spec, vec_spec, vec_spec, w_spec],
        out_specs=(act_spec, st_spec),
        out_shape=(act_shape, st_shape),
        scratch_shapes=_conv_scratch(Hp, Wp, W, CP),
        compiler_params=cparams,
    )(y1, scale1, shift1, w2r)

    scale2, shift2 = _fold_bn(st2, g2, b2, count)

    # Pass C: bn2 + residual add + relu (lane-dense elementwise store).
    out = pl.pallas_call(
        bn_add_relu_kernel,
        grid=(N,),
        in_specs=[act_spec, vec_spec, vec_spec, act_spec],
        out_specs=act_spec,
        out_shape=act_shape,
        compiler_params=cparams,
    )(z, scale2, shift2, x_p)

    return out[..., :C] if pc else out


# ---------------------------------------------------------------------------
# Pure-JAX reference (NHWC, HWIO), PyTorch training-mode BN.
# ---------------------------------------------------------------------------

def ref_forward(x, w1, w2, g1, b1, g2, b2):
    dn = ('NHWC', 'HWIO', 'NHWC')

    def bn(y, g, b):
        m = y.mean(axis=(0, 1, 2), keepdims=True)
        v = ((y - m) ** 2).mean(axis=(0, 1, 2), keepdims=True)
        return (y - m) / jnp.sqrt(v + EPS) * g + b

    out = lax.conv_general_dilated(x, w1, (1, 1), 'SAME', dimension_numbers=dn)
    out = jnp.maximum(bn(out, g1, b1), 0.0)
    out = lax.conv_general_dilated(out, w2, (1, 1), 'SAME', dimension_numbers=dn)
    out = bn(out, g2, b2)
    return jnp.maximum(out + x, 0.0)


if __name__ == "__main__":
    # BasicBlock(inplanes=8, planes=8, stride=1, downsample=None), N=2, 8x8.
    N, H, W, C = 2, 8, 8, 8
    key = jax.random.PRNGKey(0)
    k1, k2, k3 = jax.random.split(key, 3)

    x = jax.random.normal(k1, (N, H, W, C), jnp.float32)
    w1 = jax.random.normal(k2, (3, 3, C, C), jnp.float32) * 0.1
    w2 = jax.random.normal(k3, (3, 3, C, C), jnp.float32) * 0.1
    # BN affine params at PyTorch defaults (gamma=1, beta=0).
    g1 = jnp.ones((C,), jnp.float32)
    b1 = jnp.zeros((C,), jnp.float32)
    g2 = jnp.ones((C,), jnp.float32)
    b2 = jnp.zeros((C,), jnp.float32)

    out = jax.block_until_ready(basic_block_forward(x, w1, w2, g1, b1, g2, b2))
    ref = ref_forward(x, w1, w2, g1, b1, g2, b2)
    assert out.shape == (N, H, W, C)
    err = float(jnp.max(jnp.abs(out - ref)))
    # bf16 MXU inputs -> ~1e-2-scale agreement vs the f32 reference.
    assert jnp.allclose(out, ref, atol=3e-2, rtol=3e-2), f"max abs err = {err}"
    print("KERNEL_OK")
</pallas_src>

<mosaic_0001>
module attributes {stable_mosaic.version = 11 : i64} {
  func.func @conv1_stats_kernel(%arg0: i32, %arg1: memref<1x8x8x128xf32, #tpu.memory_space<vmem>>, %arg2: memref<3x384x128xbf16, #tpu.memory_space<vmem>>, %arg3: memref<1x8x8x128xf32, #tpu.memory_space<vmem>>, %arg4: memref<1x2x128xf32, #tpu.memory_space<vmem>>, %arg5: memref<1x10x16x128xbf16, #tpu.memory_space<vmem>>, %arg6: memref<80x384xbf16, #tpu.memory_space<vmem>>) attributes {dimension_semantics = [#tpu.dimension_semantics<parallel>], iteration_bounds = array<i64: 2>, scalar_prefetch = 0 : i64, scratch_operands = 2 : i64, tpu.core_type = #tpu.core_type<tc>, window_params = [{transform_indices = @transform_0, window_bounds = array<i64: 1, 8, 8, 128>}, {pipeline_mode = #tpu.pipeline_mode<synchronous>, transform_indices = @transform_1, window_bounds = array<i64: 3, 384, 128>}, {transform_indices = @transform_2, window_bounds = array<i64: 1, 8, 8, 128>}, {transform_indices = @transform_3, window_bounds = array<i64: 1, 2, 128>}]} {
    %c0 = arith.constant 0 : index
    %c0_0 = arith.constant 0 : index
    %c0_1 = arith.constant 0 : index
    %c0_2 = arith.constant 0 : index
    %0 = vector.load %arg1[%c0, %c0_0, %c0_1, %c0_2] : memref<1x8x8x128xf32, #tpu.memory_space<vmem>>, vector<1x8x8x128xf32>
    %1 = vector.shape_cast %0 : vector<1x8x8x128xf32> to vector<8x8x128xf32>
    %2 = arith.truncf %1 : vector<8x8x128xf32> to vector<8x8x128xbf16>
    %cst = arith.constant 0.000000e+00 : bf16
    %3 = vector.broadcast %cst : bf16 to vector<1x16x128xbf16>
    %cst_3 = arith.constant 0.000000e+00 : bf16
    %4 = vector.broadcast %cst_3 : bf16 to vector<10x1x128xbf16>
    %c0_4 = arith.constant 0 : index
    %c0_5 = arith.constant 0 : index
    %c0_6 = arith.constant 0 : index
    %c0_7 = arith.constant 0 : index
    %5 = vector.load %arg5[%c0_4, %c0_5, %c0_6, %c0_7] : memref<1x10x16x128xbf16, #tpu.memory_space<vmem>>, vector<1x1x16x128xbf16>
    %6 = vector.shape_cast %5 : vector<1x1x16x128xbf16> to vector<1x16x128xbf16>
    %7 = vector.shape_cast %3 : vector<1x16x128xbf16> to vector<1x1x16x128xbf16>
    tpu.vector_store %arg5[%c0_4, %c0_5, %c0_6, %c0_7], %7 {strides = array<i32>} : memref<1x10x16x128xbf16, #tpu.memory_space<vmem>>, vector<1x1x16x128xbf16>,
    %c0_8 = arith.constant 0 : index
    %c9 = arith.constant 9 : index
    %c0_9 = arith.constant 0 : index
    %c0_10 = arith.constant 0 : index
    %8 = vector.load %arg5[%c0_8, %c9, %c0_9, %c0_10] : memref<1x10x16x128xbf16, #tpu.memory_space<vmem>>, vector<1x1x16x128xbf16>
    %9 = vector.shape_cast %8 : vector<1x1x16x128xbf16> to vector<1x16x128xbf16>
    %10 = vector.shape_cast %3 : vector<1x16x128xbf16> to vector<1x1x16x128xbf16>
    tpu.vector_store %arg5[%c0_8, %c9, %c0_9, %c0_10], %10 {strides = array<i32>} : memref<1x10x16x128xbf16, #tpu.memory_space<vmem>>, vector<1x1x16x128xbf16>,
    %c0_11 = arith.constant 0 : index
    %c0_12 = arith.constant 0 : index
    %c0_13 = arith.constant 0 : index
    %c0_14 = arith.constant 0 : index
    %11 = vector.load %arg5[%c0_11, %c0_12, %c0_13, %c0_14] : memref<1x10x16x128xbf16, #tpu.memory_space<vmem>>, vector<1x10x1x128xbf16>
    %12 = vector.shape_cast %11 : vector<1x10x1x128xbf16> to vector<10x1x128xbf16>
    %13 = vector.shape_cast %4 : vector<10x1x128xbf16> to vector<1x10x1x128xbf16>
    tpu.vector_store %arg5[%c0_11, %c0_12, %c0_13, %c0_14], %13 {strides = array<i32>} : memref<1x10x16x128xbf16, #tpu.memory_space<vmem>>, vector<1x10x1x128xbf16>,
    %c0_15 = arith.constant 0 : index
    %c0_16 = arith.constant 0 : index
    %c9_17 = arith.constant 9 : index
    %c0_18 = arith.constant 0 : index
    %14 = vector.load %arg5[%c0_15, %c0_16, %c9_17, %c0_18] : memref<1x10x16x128xbf16, #tpu.memory_space<vmem>>, vector<1x10x1x128xbf16>
    %15 = vector.shape_cast %14 : vector<1x10x1x128xbf16> to vector<10x1x128xbf16>
    %16 = vector.shape_cast %4 : vector<10x1x128xbf16> to vector<1x10x1x128xbf16>
    tpu.vector_store %arg5[%c0_15, %c0_16, %c9_17, %c0_18], %16 {strides = array<i32>} : memref<1x10x16x128xbf16, #tpu.memory_space<vmem>>, vector<1x10x1x128xbf16>,
    %c0_19 = arith.constant 0 : index
    %c1 = arith.constant 1 : index
    %c1_20 = arith.constant 1 : index
    %c0_21 = arith.constant 0 : index
    %17 = vector.load %arg5[%c0_19, %c1, %c1_20, %c0_21] : memref<1x10x16x128xbf16, #tpu.memory_space<vmem>>, vector<1x8x8x128xbf16>
    %18 = vector.shape_cast %17 : vector<1x8x8x128xbf16> to vector<8x8x128xbf16>
    %19 = vector.shape_cast %2 : vector<8x8x128xbf16> to vector<1x8x8x128xbf16>
    tpu.vector_store %arg5[%c0_19, %c1, %c1_20, %c0_21], %19 {strides = array<i32>} : memref<1x10x16x128xbf16, #tpu.memory_space<vmem>>, vector<1x8x8x128xbf16>,
    %c0_22 = arith.constant 0 : index
    %c0_23 = arith.constant 0 : index
    %c0_24 = arith.constant 0 : index
    %c0_25 = arith.constant 0 : index
    %20 = vector.load %arg5[%c0_22, %c0_23, %c0_24, %c0_25] : memref<1x10x16x128xbf16, #tpu.memory_space<vmem>>, vector<1x10x8x128xbf16>
    %21 = vector.shape_cast %20 : vector<1x10x8x128xbf16> to vector<10x8x128xbf16>
    %22 = vector.shape_cast %21 : vector<10x8x128xbf16> to vector<80x128xbf16>
    %c0_26 = arith.constant 0 : index
    %c0_27 = arith.constant 0 : index
    %23 = vector.load %arg6[%c0_26, %c0_27] : memref<80x384xbf16, #tpu.memory_space<vmem>>, vector<80x128xbf16>
    tpu.vector_store %arg6[%c0_26, %c0_27], %22 {strides = array<i32>} : memref<80x384xbf16, #tpu.memory_space<vmem>>, vector<80x128xbf16>,
    %c0_28 = arith.constant 0 : index
    %c0_29 = arith.constant 0 : index
    %c1_30 = arith.constant 1 : index
    %c0_31 = arith.constant 0 : index
    %24 = vector.load %arg5[%c0_28, %c0_29, %c1_30, %c0_31] : memref<1x10x16x128xbf16, #tpu.memory_space<vmem>>, vector<1x10x8x128xbf16>
    %25 = vector.shape_cast %24 : vector<1x10x8x128xbf16> to vector<10x8x128xbf16>
    %26 = vector.shape_cast %25 : vector<10x8x128xbf16> to vector<80x128xbf16>
    %c0_32 = arith.constant 0 : index
    %c128 = arith.constant 128 : index
    %27 = vector.load %arg6[%c0_32, %c128] : memref<80x384xbf16, #tpu.memory_space<vmem>>, vector<80x128xbf16>
    tpu.vector_store %arg6[%c0_32, %c128], %26 {strides = array<i32>} : memref<80x384xbf16, #tpu.memory_space<vmem>>, vector<80x128xbf16>,
    %c0_33 = arith.constant 0 : index
    %c0_34 = arith.constant 0 : index
    %c2 = arith.constant 2 : index
    %c0_35 = arith.constant 0 : index
    %28 = vector.load %arg5[%c0_33, %c0_34, %c2, %c0_35] : memref<1x10x16x128xbf16, #tpu.memory_space<vmem>>, vector<1x10x8x128xbf16>
    %29 = vector.shape_cast %28 : vector<1x10x8x128xbf16> to vector<10x8x128xbf16>
    %30 = vector.shape_cast %29 : vector<10x8x128xbf16> to vector<80x128xbf16>
    %c0_36 = arith.constant 0 : index
    %c256 = arith.constant 256 : index
    %31 = vector.load %arg6[%c0_36, %c256] : memref<80x384xbf16, #tpu.memory_space<vmem>>, vector<80x128xbf16>
    tpu.vector_store %arg6[%c0_36, %c256], %30 {strides = array<i32>} : memref<80x384xbf16, #tpu.memory_space<vmem>>, vector<80x128xbf16>,
    %cst_37 = arith.constant 0.000000e+00 : f32
    %32 = vector.broadcast %cst_37 : f32 to vector<64x128xf32>
    %c0_38 = arith.constant 0 : index
    %c0_39 = arith.constant 0 : index
    %33 = vector.load %arg6[%c0_38, %c0_39] : memref<80x384xbf16, #tpu.memory_space<vmem>>, vector<64x384xbf16>
    %c0_40 = arith.constant 0 : index
    %c0_41 = arith.constant 0 : index
    %c0_42 = arith.constant 0 : index
    %34 = vector.load %arg2[%c0_40, %c0_41, %c0_42] : memref<3x384x128xbf16, #tpu.memory_space<vmem>>, vector<1x384x128xbf16>
    %35 = vector.shape_cast %34 : vector<1x384x128xbf16> to vector<384x128xbf16>
    %cst_43 = arith.constant dense<0.000000e+00> : vector<64x128xf32>
    %36 = tpu.matmul %33, %35, %cst_43 {dimension_numbers = #tpu.dot_dimension_numbers<[1], [0], [0], [1], [0, 0, 1, 1], [], []>} : vector<64x384xbf16>, vector<384x128xbf16>, vector<64x128xf32> -> vector<64x128xf32>
    %37 = arith.addf %32, %36 : vector<64x128xf32>
    %c8 = arith.constant 8 : index
    %c0_44 = arith.constant 0 : index
    %38 = vector.load %arg6[%c8, %c0_44] : memref<80x384xbf16, #tpu.memory_space<vmem>>, vector<64x384xbf16>
    %c1_45 = arith.constant 1 : index
    %c0_46 = arith.constant 0 : index
    %c0_47 = arith.constant 0 : index
    %39 = vector.load %arg2[%c1_45, %c0_46, %c0_47] : memref<3x384x128xbf16, #tpu.memory_space<vmem>>, vector<1x384x128xbf16>
    %40 = vector.shape_cast %39 : vector<1x384x128xbf16> to vector<384x128xbf16>
    %cst_48 = arith.constant dense<0.000000e+00> : vector<64x128xf32>
    %41 = tpu.matmul %38, %40, %cst_48 {dimension_numbers = #tpu.dot_dimension_numbers<[1], [0], [0], [1], [0, 0, 1, 1], [], []>} : vector<64x384xbf16>, vector<384x128xbf16>, vector<64x128xf32> -> vector<64x128xf32>
    %42 = arith.addf %37, %41 : vector<64x128xf32>
    %c16 = arith.constant 16 : index
    %c0_49 = arith.constant 0 : index
    %43 = vector.load %arg6[%c16, %c0_49] : memref<80x384xbf16, #tpu.memory_space<vmem>>, vector<64x384xbf16>
    %c2_50 = arith.constant 2 : index
    %c0_51 = arith.constant 0 : index
    %c0_52 = arith.constant 0 : index
    %44 = vector.load %arg2[%c2_50, %c0_51, %c0_52] : memref<3x384x128xbf16, #tpu.memory_space<vmem>>, vector<1x384x128xbf16>
    %45 = vector.shape_cast %44 : vector<1x384x128xbf16> to vector<384x128xbf16>
    %cst_53 = arith.constant dense<0.000000e+00> : vector<64x128xf32>
    %46 = tpu.matmul %43, %45, %cst_53 {dimension_numbers = #tpu.dot_dimension_numbers<[1], [0], [0], [1], [0, 0, 1, 1], [], []>} : vector<64x384xbf16>, vector<384x128xbf16>, vector<64x128xf32> -> vector<64x128xf32>
    %47 = arith.addf %42, %46 : vector<64x128xf32>
    %48 = vector.shape_cast %47 : vector<64x128xf32> to vector<8x8x128xf32>
    %c0_54 = arith.constant 0 : index
    %c0_55 = arith.constant 0 : index
    %c0_56 = arith.constant 0 : index
    %c0_57 = arith.constant 0 : index
    %49 = vector.load %arg3[%c0_54, %c0_55, %c0_56, %c0_57] : memref<1x8x8x128xf32, #tpu.memory_space<vmem>>, vector<1x8x8x128xf32>
    %50 = vector.shape_cast %49 : vector<1x8x8x128xf32> to vector<8x8x128xf32>
    %51 = vector.shape_cast %48 : vector<8x8x128xf32> to vector<1x8x8x128xf32>
    tpu.vector_store %arg3[%c0_54, %c0_55, %c0_56, %c0_57], %51 {strides = array<i32>} : memref<1x8x8x128xf32, #tpu.memory_space<vmem>>, vector<1x8x8x128xf32>,
    %cst_58 = arith.constant dense<0.000000e+00> : vector<128xf32>
    %52 = vector.multi_reduction <add>, %47, %cst_58 [0] : vector<64x128xf32> to vector<128xf32>
    %53 = vector.shape_cast %52 : vector<128xf32> to vector<1x128xf32>
    %54 = arith.mulf %47, %47 : vector<64x128xf32>
    %cst_59 = arith.constant dense<0.000000e+00> : vector<128xf32>
    %55 = vector.multi_reduction <add>, %54, %cst_59 [0] : vector<64x128xf32> to vector<128xf32>
    %56 = vector.shape_cast %55 : vector<128xf32> to vector<1x128xf32>
    %57 = tpu.iota {dimensions = array<i32: 0>} : vector<2x128xi32>
    %c0_i32 = arith.constant 0 : i32
    %58 = vector.broadcast %c0_i32 : i32 to vector<2x128xi32>
    %59 = arith.cmpi eq, %57, %58 : vector<2x128xi32>
    %60 = vector.shape_cast %53 : vector<1x128xf32> to vector<1x128xf32>
    %61 = vector.broadcast %60 : vector<1x128xf32> to vector<2x128xf32>
    %62 = vector.shape_cast %56 : vector<1x128xf32> to vector<1x128xf32>
    %63 = vector.broadcast %62 : vector<1x128xf32> to vector<2x128xf32>
    %64 = arith.select %59, %61, %63 : vector<2x128xi1>, vector<2x128xf32>
    %c0_60 = arith.constant 0 : index
    %c0_61 = arith.constant 0 : index
    %c0_62 = arith.constant 0 : index
    %65 = vector.load %arg4[%c0_60, %c0_61, %c0_62] : memref<1x2x128xf32, #tpu.memory_space<vmem>>, vector<1x2x128xf32>
    %66 = vector.shape_cast %65 : vector<1x2x128xf32> to vector<2x128xf32>
    %67 = vector.shape_cast %64 : vector<2x128xf32> to vector<1x2x128xf32>
    tpu.vector_store %arg4[%c0_60, %c0_61, %c0_62], %67 {strides = array<i32>} : memref<1x2x128xf32, #tpu.memory_space<vmem>>, vector<1x2x128xf32>,
    return
  }
  func.func @transform_0(%arg0: i32) -> (i32, i32, i32, i32) {
    %c0_i32 = arith.constant 0 : i32
    %c0_i32_0 = arith.constant 0 : i32
    %c0_i32_1 = arith.constant 0 : i32
    %c0_i32_2 = arith.constant 0 : i32
    return %arg0, %c0_i32, %c0_i32_0, %c0_i32_1 : i32, i32, i32, i32
  }
  func.func @transform_1(%arg0: i32) -> (i32, i32, i32) {
    %c0_i32 = arith.constant 0 : i32
    %c0_i32_0 = arith.constant 0 : i32
    %c0_i32_1 = arith.constant 0 : i32
    %c0_i32_2 = arith.constant 0 : i32
    return %c0_i32, %c0_i32_0, %c0_i32_1 : i32, i32, i32
  }
  func.func @transform_2(%arg0: i32) -> (i32, i32, i32, i32) {
    %c0_i32 = arith.constant 0 : i32
    %c0_i32_0 = arith.constant 0 : i32
    %c0_i32_1 = arith.constant 0 : i32
    %c0_i32_2 = arith.constant 0 : i32
    return %arg0, %c0_i32, %c0_i32_0, %c0_i32_1 : i32, i32, i32, i32
  }
  func.func @transform_3(%arg0: i32) -> (i32, i32, i32) {
    %c0_i32 = arith.constant 0 : i32
    %c0_i32_0 = arith.constant 0 : i32
    %c0_i32_1 = arith.constant 0 : i32
    return %arg0, %c0_i32, %c0_i32_0 : i32, i32, i32
  }
}

</mosaic_0001>

<llo_original>
// kernel: tpu_custom_call.1
$region0: #{tpu_custom_call.1}
  #allocation0 [shape = 'u32[]', space=smem, size = 0x4, offset = 0x4, fixed_abs, tag = 'smem constant byte address 0x4 - core index']
  #allocation1 [shape = 'u32[144,128]{1,0:T(1,128)}', space=vmem, size = 0x12000, scoped, tag = 'internal scratch']
  #allocation2 [shape = 'bf16[1,10,16,128]{3,2,1,0:T(8,128)(2,1)}', space=vmem, size = 0xa000, scoped, tag = 'scratch operand']
  #allocation3 [shape = 'bf16[80,384]{1,0:T(8,128)(2,1)}', space=vmem, size = 0xf000, scoped, tag = 'scratch operand']
  %s0 = inlined_call_operand.hbm [shape: f32[2,8,8,128], index: 0, kind: input, shape index: {}]
  %s1 = inlined_call_operand.hbm [shape: bf16[3,384,128], index: 1, kind: input, shape index: {}]
  %s2 = inlined_call_operand.hbm [shape: f32[2,8,8,128], index: 2, kind: output, shape index: {0}]
  %s3 = inlined_call_operand.hbm [shape: f32[2,2,128], index: 3, kind: output, shape index: {1}]
  %4 = xla_tuple %s2, %s3
  %s5 = sld [smem:[#allocation0]]
  $region57: #{tpu_custom_call.1} parent=0
    _
  %s7 = ssub.s32 1, %s5
  %s8 = scalar_select 0, %s7, %s5
  $region1: #{tpu_custom_call.1} parent=0
    #allocation4 [shape = 'u8[65536]{0}', space=vmem, size = 0x10000, scoped, tag = 'input window, operand 0']
    #allocation5 [shape = 's32[2]{0}', space=sflag, size = 0x8, scoped, tag = 'scoped memory for tpu_custom_call.1']
    #allocation6 [shape = 's32[2]{0}', space=sflag, size = 0x8, scoped, tag = 'scoped memory for tpu_custom_call.1']
    #allocation7 [shape = 'u8[294912]{0}', space=vmem, size = 0x48000, scoped, tag = 'input window, operand 1, single buffered']
    #allocation8 [shape = 's32[1]{0}', space=sflag, size = 0x4, scoped, tag = 'scoped memory for tpu_custom_call.1']
    #allocation9 [shape = 'u8[65536]{0}', space=vmem, size = 0x10000, scoped, tag = 'output window, operand 0']
    #allocation10 [shape = 'u8[2048]{0}', space=vmem, size = 0x800, scoped, tag = 'output window, operand 1']
    #allocation11 [shape = 's32[2]{0}', space=sflag, size = 0x8, scoped, tag = 'scoped memory for tpu_custom_call.1']
    %9 = vsyncpa [#allocation5], 0
    %s10 = scalar_lea.sflag [#allocation5], 1
    %11 = vsyncpa %s10, 0
    %12 = vsyncpa [#allocation8], 0
    %13 = vsyncpa [#allocation6], 0
    %s14 = scalar_lea.sflag [#allocation6], 1
    %15 = vsyncpa %s14, 0
    %16 = vsyncpa [#allocation11], 0
    %s17 = scalar_lea.sflag [#allocation11], 1
    %18 = vsyncpa %s17, 0
    loop: start=0, step=1, limit=4
    $region2: #{tpu_custom_call.1} parent=1 // loop_pre_header
      _
    $region3: #{tpu_custom_call.1} parent=1 // loop_header
      %s20 = sphi 0, %s24
      %p21 = scmp.ge.s32.totalorder %s20, 4
      %s30 = sphi 0, %s32
      %s33 = sphi 0, %s30
      %s34 = sphi 0, %s33
      %s50 = sphi 0, %s34
      %s54 = sphi 0, %s54
      %s56 = sphi 0, %s54
      %s57 = sphi 0, %s56
      %s71 = sphi 0, %s57
      %s77 = sphi 0, %s79
      %s80 = sphi 0, %s77
      %s81 = sphi 0, %s80
      %s97 = sphi 0, %s81
      %s103 = sphi 0, %s105
      %s106 = sphi 0, %s103
      %s107 = sphi 0, %s106
      %s123 = sphi 0, %s107
    $region4: #{tpu_custom_call.1} parent=1 // loop_header_branch
      %23 = sbr.rel (%p21) target = $region8
    $region5: #{tpu_custom_call.1} parent=1 // loop_body
      %s25 = ssub.s32 %s20, 1
      %s26 = ssub.s32 %s20, 2
      %s27 = sadd.s32 %s20, 1
      %s28 = ssub.s32 %s20, %s27
      %p29 = scmp.eq.s32.totalorder %s28, 0
      %s31 = sadd.s32 %s30, 1
      %s32 = scalar_select %p29, %s30, %s31
      %p35 = pneg %p29
      %p36 = scmp.eq.s32.totalorder %s20, 1
      %p37 = por %p35, %p36
      %p38 = scmp.ne.s32.totalorder %s30, %s33
      %p39 = scmp.eq.s32.totalorder %s20, 0
      %p40 = por %p38, %p39
      %p41 = scmp.ne.s32.totalorder %s30, %s33
      %p42 = scmp.eq.s32.totalorder %s25, 1
      %p43 = por %p41, %p42
      %p44 = scmp.ne.s32.totalorder %s33, %s34
      %p45 = scmp.eq.s32.totalorder %s25, 0
      %p46 = por %p44, %p45
      %p47 = scmp.ne.s32.totalorder %s33, %s34
      %p48 = scmp.eq.s32.totalorder %s26, 1
      %p49 = por %p47, %p48
      %p51 = scmp.ne.s32.totalorder %s34, %s50
      %p52 = scmp.eq.s32.totalorder %s26, 0
      %p53 = por %p51, %p52
      %s55 = sadd.s32 %s54, 1
      %p58 = scmp.eq.s32.totalorder %s20, 1
      %p59 = scmp.ne.s32.totalorder %s54, %s56
      %p60 = scmp.eq.s32.totalorder %s20, 0
      %p61 = por %p59, %p60
      %p62 = scmp.ne.s32.totalorder %s54, %s56
      %p63 = scmp.eq.s32.totalorder %s25, 1
      %p64 = por %p62, %p63
      %p65 = scmp.ne.s32.totalorder %s56, %s57
      %p66 = scmp.eq.s32.totalorder %s25, 0
      %p67 = por %p65, %p66
      %p68 = scmp.ne.s32.totalorder %s56, %s57
      %p69 = scmp.eq.s32.totalorder %s26, 1
      %p70 = por %p68, %p69
      %p72 = scmp.ne.s32.totalorder %s57, %s71
      %p73 = scmp.eq.s32.totalorder %s26, 0
      %p74 = por %p72, %p73
      %s75 = ssub.s32 %s20, %s27
      %p76 = scmp.eq.s32.totalorder %s75, 0
      %s78 = sadd.s32 %s77, 1
      %s79 = scalar_select %p76, %s77, %s78
      %p82 = pneg %p76
      %p83 = scmp.eq.s32.totalorder %s20, 1
      %p84 = por %p82, %p83
      %p85 = scmp.ne.s32.totalorder %s77, %s80
      %p86 = scmp.eq.s32.totalorder %s20, 0
      %p87 = por %p85, %p86
      %p88 = scmp.ne.s32.totalorder %s77, %s80
      %p89 = scmp.eq.s32.totalorder %s25, 1
      %p90 = por %p88, %p89
      %p91 = scmp.ne.s32.totalorder %s80, %s81
      %p92 = scmp.eq.s32.totalorder %s25, 0
      %p93 = por %p91, %p92
      %p94 = scmp.ne.s32.totalorder %s80, %s81
      %p95 = scmp.eq.s32.totalorder %s26, 1
      %p96 = por %p94, %p95
      %p98 = scmp.ne.s32.totalorder %s81, %s97
      %p99 = scmp.eq.s32.totalorder %s26, 0
      %p100 = por %p98, %p99
      %s101 = ssub.s32 %s20, %s27
      %p102 = scmp.eq.s32.totalorder %s101, 0
      %s104 = sadd.s32 %s103, 1
      %s105 = scalar_select %p102, %s103, %s104
      %p108 = pneg %p102
      %p109 = scmp.eq.s32.totalorder %s20, 1
      %p110 = por %p108, %p109
      %p111 = scmp.ne.s32.totalorder %s103, %s106
      %p112 = scmp.eq.s32.totalorder %s20, 0
      %p113 = por %p111, %p112
      %p114 = scmp.ne.s32.totalorder %s103, %s106
      %p115 = scmp.eq.s32.totalorder %s25, 1
      %p116 = por %p114, %p115
      %p117 = scmp.ne.s32.totalorder %s106, %s107
      %p118 = scmp.eq.s32.totalorder %s25, 0
      %p119 = por %p117, %p118
      %p120 = scmp.ne.s32.totalorder %s106, %s107
      %p121 = scmp.eq.s32.totalorder %s26, 1
      %p122 = por %p120, %p121
      %p124 = scmp.ne.s32.totalorder %s107, %s123
      %p125 = scmp.eq.s32.totalorder %s26, 0
      %p126 = por %p124, %p125
      %p127 = scmp.le.s32.totalorder 1, %s20
      %p128 = scmp.lt.s32.totalorder %s20, 3
      %p129 = pnand %p127, %p128
      %p130 = pneg %p129
      // Predicated region
      $region9: #{tpu_custom_call.1} parent=5 // pred_check
        _
      $region10: #{tpu_custom_call.1} parent=5 // pred_check_branch
        %132 = sbr.rel (%p129) target = $region12
      $region11: #{tpu_custom_call.1} parent=5 // pred_region
        %s133 = ssub.s32 %s20, 1
        // Predicated region
        $region13: #{tpu_custom_call.1} parent=11 // pred_check
          %p134 = pneg %p67
        $region14: #{tpu_custom_call.1} parent=11 // pred_check_branch
          %136 = sbr.rel (%p134) target = $region16
        $region15: #{tpu_custom_call.1} parent=11 // pred_region
          %s138 = ssub.s32 9216, 9216
          %139 = vsyncadd [#allocation8], %s138
          %s140 = sshll.u32 [#allocation7], 4
          %s141 = int_to_ptr.vmem [resolvable:$true] %s140
          %146 = dma.hbm_to_vmem [thread:$0]  %s1, 9216, %s141, [#allocation8], 64, 64, 4
        $region16: #{tpu_custom_call.1} parent=11 // pred_fallthru
          _
      $region12: #{tpu_custom_call.1} parent=5 // pred_fallthru
        _
      %p147 = scmp.lt.s32.totalorder %s20, 2
      // Predicated region
      $region17: #{tpu_custom_call.1} parent=5 // pred_check
        %p148 = pneg %p147
      $region18: #{tpu_custom_call.1} parent=5 // pred_check_branch
        %150 = sbr.rel (%p148) target = $region20
      $region19: #{tpu_custom_call.1} parent=5 // pred_region
        // Predicated region
        $region21: #{tpu_custom_call.1} parent=19 // pred_check
          %p151 = pneg %p40
        $region22: #{tpu_custom_call.1} parent=19 // pred_check_branch
          %153 = sbr.rel (%p151) target = $region24
        $region23: #{tpu_custom_call.1} parent=19 // pred_region
          %s154 = sand.u32 %s30, 1
          %s155 = scalar_lea.sflag [#allocation5], %s154
          %s156 = sand.u32 %s30, 1
          %s157 = smul.addr %s156, 64
          %s158 = scalar_lea.vmem [#allocation4], %s157
          %s160 = ssub.s32 1024, 1024
          %161 = vsyncadd %s155, %s160
          %s162 = smul.addr %s20, 8
          %s163 = smul.addr %s162, 128
          %s164 = scalar_lea.hbm %s0, %s163
          %s165 = sshll.u32 %s158, 4
          %s166 = int_to_ptr.vmem [resolvable:$true] %s165
          %171 = dma.hbm_to_vmem [thread:$0]  %s164, 1024, %s166, %s155, 128, 128, 8
        $region24: #{tpu_custom_call.1} parent=19 // pred_fallthru
          _
      $region20: #{tpu_custom_call.1} parent=5 // pred_fallthru
        _
      %p172 = scmp.le.s32.totalorder 1, %s20
      %p173 = scmp.lt.s32.totalorder %s20, 3
      %p174 = pnand %p172, %p173
      %p175 = pneg %p174
      // Predicated region
      $region25: #{tpu_custom_call.1} parent=5 // pred_check
        _
      $region26: #{tpu_custom_call.1} parent=5 // pred_check_branch
        %177 = sbr.rel (%p174) target = $region28
      $region27: #{tpu_custom_call.1} parent=5 // pred_region
        %s178 = ssub.s32 %s20, 1
        %s179 = sand.u32 %s33, 1
        %s180 = scalar_lea.sflag [#allocation5], %s179
        %s181 = sand.u32 %s33, 1
        %s182 = smul.addr %s181, 64
        %s183 = scalar_lea.vmem [#allocation4], %s182
        // Predicated region
        $region29: #{tpu_custom_call.1} parent=27 // pred_check
          %p184 = pneg %p46
        $region30: #{tpu_custom_call.1} parent=27 // pred_check_branch
          %186 = sbr.rel (%p184) target = $region32
        $region31: #{tpu_custom_call.1} parent=27 // pred_region
          %187 = dma.done %s180, 1024
        $region32: #{tpu_custom_call.1} parent=27 // pred_fallthru
          _
        // Predicated region
        $region33: #{tpu_custom_call.1} parent=27 // pred_check
          %p188 = pneg %p67
        $region34: #{tpu_custom_call.1} parent=27 // pred_check_branch
          %190 = sbr.rel (%p188) target = $region36
        $region35: #{tpu_custom_call.1} parent=27 // pred_region
          %191 = dma.done [#allocation8], 9216
        $region36: #{tpu_custom_call.1} parent=27 // pred_fallthru
          _
        %s192 = sand.u32 %s33, 1
        %s193 = scalar_lea.sflag [#allocation5], %s192
        %s194 = sand.u32 %s33, 1
        %s195 = smul.addr %s194, 64
        %s196 = scalar_lea.vmem [#allocation4], %s195
        %p197 = pneg %p46
        %p198 = pneg %p43
        %p199 = pneg %p67
        %p200 = pneg %p64
        %p201 = pneg %p93
        %p202 = pneg %p90
        %s203 = sand.u32 %s80, 1
        %s204 = scalar_lea.sflag [#allocation6], %s203
        %s205 = sand.u32 %s80, 1
        %s206 = smul.addr %s205, 64
        %s207 = scalar_lea.vmem [#allocation9], %s206
        %p208 = pneg %p119
        %p209 = pneg %p116
        %s210 = sand.u32 %s106, 1
        %s211 = scalar_lea.sflag [#allocation11], %s210
        %s212 = sand.u32 %s106, 1
        %s213 = smul.addr %s212, 2
        %s214 = scalar_lea.vmem [#allocation10], %s213
        %v216 = vld [vmem:[%s183] sm:$0xff]
        %v217 = vld [vmem:[%s183 + $0x8] sm:$0xff]
        %v218 = vld [vmem:[%s183 + $0x10] sm:$0xff]
        %v219 = vld [vmem:[%s183 + $0x18] sm:$0xff]
        %v220 = vld [vmem:[%s183 + $0x20] sm:$0xff]
        %v221 = vld [vmem:[%s183 + $0x28] sm:$0xff]
        %v222 = vld [vmem:[%s183 + $0x30] sm:$0xff]
        %v223 = vld [vmem:[%s183 + $0x38] sm:$0xff]
        %v224 = vpack.c.bf16 %v216, %v216
        %v225 = vpack.c.bf16 %v217, %v217
        %v226 = vpack.c.bf16 %v218, %v218
        %v227 = vpack.c.bf16 %v219, %v219
        %v228 = vpack.c.bf16 %v220, %v220
        %v229 = vpack.c.bf16 %v221, %v221
        %v230 = vpack.c.bf16 %v222, %v222
        %v231 = vpack.c.bf16 %v223, %v223
        %232 = vst [vmem:[#allocation2] sm:$0xf] 0
        %233 = vst [vmem:[#allocation2 + $0x4] sm:$0xf] 0
        %s234 = scalar_lea.vmem [#allocation2], 72
        %235 = vst [vmem:[%s234] sm:$0xf] 0
        %236 = vst [vmem:[%s234 + $0x4] sm:$0xf] 0
        %vm237 = vcmask 1040384
        %vm238 = vsmask.f32 256
        %vm239 = vmand %vm237, %vm238
        %v240 = vld [vmem:[#allocation2] sm:$0x1]
        %v241 = vsel %vm239, 0, %v240
        %242 = vst [vmem:[#allocation2] sm:$0x1] %v241
        %v243 = vld [vmem:[#allocation2 + $0x8] sm:$0x1]
        %v244 = vsel %vm239, 0, %v243
        %245 = vst [vmem:[#allocation2 + $0x8] sm:$0x1] %v244
        %v246 = vld [vmem:[#allocation2 + $0x10] sm:$0x1]
        %v247 = vsel %vm239, 0, %v246
        %248 = vst [vmem:[#allocation2 + $0x10] sm:$0x1] %v247
        %v249 = vld [vmem:[#allocation2 + $0x18] sm:$0x1]
        %v250 = vsel %vm239, 0, %v249
        %251 = vst [vmem:[#allocation2 + $0x18] sm:$0x1] %v250
        %v252 = vld [vmem:[#allocation2 + $0x20] sm:$0x1]
        %v253 = vsel %vm239, 0, %v252
        %254 = vst [vmem:[#allocation2 + $0x20] sm:$0x1] %v253
        %v255 = vld [vmem:[#allocation2 + $0x28] sm:$0x1]
        %v256 = vsel %vm239, 0, %v255
        %257 = vst [vmem:[#allocation2 + $0x28] sm:$0x1] %v256
        %v258 = vld [vmem:[#allocation2 + $0x30] sm:$0x1]
        %v259 = vsel %vm239, 0, %v258
        %260 = vst [vmem:[#allocation2 + $0x30] sm:$0x1] %v259
        %v261 = vld [vmem:[#allocation2 + $0x38] sm:$0x1]
        %v262 = vsel %vm239, 0, %v261
        %263 = vst [vmem:[#allocation2 + $0x38] sm:$0x1] %v262
        %v264 = vld [vmem:[#allocation2 + $0x40] sm:$0x1]
        %v265 = vsel %vm239, 0, %v264
        %266 = vst [vmem:[#allocation2 + $0x40] sm:$0x1] %v265
        %v267 = vld [vmem:[#allocation2 + $0x48] sm:$0x1]
        %v268 = vsel %vm239, 0, %v267
        %269 = vst [vmem:[#allocation2 + $0x48] sm:$0x1] %v268
        %vm270 = vsmask.f32 7938
        %vm271 = vmand %vm237, %vm270
        %v272 = vld [vmem:[#allocation2 + $0x4] sm:$0x1]
        %v273 = vsel %vm271, 0, %v272
        %274 = vst [vmem:[#allocation2 + $0x4] sm:$0x1] %v273
        %v275 = vld [vmem:[#allocation2 + $0xc] sm:$0x1]
        %v276 = vsel %vm271, 0, %v275
        %277 = vst [vmem:[#allocation2 + $0xc] sm:$0x1] %v276
        %v278 = vld [vmem:[#allocation2 + $0x14] sm:$0x1]
        %v279 = vsel %vm271, 0, %v278
        %280 = vst [vmem:[#allocation2 + $0x14] sm:$0x1] %v279
        %v281 = vld [vmem:[#allocation2 + $0x1c] sm:$0x1]
        %v282 = vsel %vm271, 0, %v281
        %283 = vst [vmem:[#allocation2 + $0x1c] sm:$0x1] %v282
        %v284 = vld [vmem:[#allocation2 + $0x24] sm:$0x1]
        %v285 = vsel %vm271, 0, %v284
        %286 = vst [vmem:[#allocation2 + $0x24] sm:$0x1] %v285
        %v287 = vld [vmem:[#allocation2 + $0x2c] sm:$0x1]
        %v288 = vsel %vm271, 0, %v287
        %289 = vst [vmem:[#allocation2 + $0x2c] sm:$0x1] %v288
        %v290 = vld [vmem:[#allocation2 + $0x34] sm:$0x1]
        %v291 = vsel %vm271, 0, %v290
        %292 = vst [vmem:[#allocation2 + $0x34] sm:$0x1] %v291
        %v293 = vld [vmem:[#allocation2 + $0x3c] sm:$0x1]
        %v294 = vsel %vm271, 0, %v293
        %295 = vst [vmem:[#allocation2 + $0x3c] sm:$0x1] %v294
        %v296 = vld [vmem:[#allocation2 + $0x44] sm:$0x1]
        %v297 = vsel %vm271, 0, %v296
        %298 = vst [vmem:[#allocation2 + $0x44] sm:$0x1] %v297
        %v299 = vld [vmem:[#allocation2 + $0x4c] sm:$0x1]
        %v300 = vsel %vm271, 0, %v299
        %301 = vst [vmem:[#allocation2 + $0x4c] sm:$0x1] %v300
        %v310 = vunpack.c.l.b16 %v224
        %v311 = vunpack.c.l.b16 %v225
        %v312 = vunpack.c.l.b16 %v226
        %v313 = vunpack.c.l.b16 %v227
        %v314 = vunpack.c.l.b16 %v228
        %v315 = vunpack.c.l.b16 %v229
        %v316 = vunpack.c.l.b16 %v230
        %v317 = vunpack.c.l.b16 %v231
        %v318 = vpack.c.b16 %v310, %v310
        %v319 = vpack.c.b16 %v311, %v311
        %v320 = vpack.c.b16 %v312, %v312
        %v321 = vpack.c.b16 %v313, %v313
        %v322 = vpack.c.b16 %v314, %v314
        %v323 = vpack.c.b16 %v315, %v315
        %v324 = vpack.c.b16 %v316, %v316
        %v325 = vpack.c.b16 %v317, %v317
        %v327 = vshrl.u32 %v318, 16
        %v329 = vrot.slane %v327, 7
        %v330 = vshll.u32 %v318, 16
        %v332 = vor.u32 %v329, %v330
        %v333 = vrot.slane %v329, 4
        %v335 = vshrl.u32 %v319, 16
        %v337 = vrot.slane %v335, 7
        %v338 = vshll.u32 %v319, 16
        %v340 = vor.u32 %v337, %v338
        %v341 = vrot.slane %v337, 4
        %v343 = vshrl.u32 %v320, 16
        %v345 = vrot.slane %v343, 7
        %v346 = vshll.u32 %v320, 16
        %v348 = vor.u32 %v345, %v346
        %v349 = vrot.slane %v345, 4
        %v351 = vshrl.u32 %v321, 16
        %v353 = vrot.slane %v351, 7
        %v354 = vshll.u32 %v321, 16
        %v356 = vor.u32 %v353, %v354
        %v357 = vrot.slane %v353, 4
        %v359 = vshrl.u32 %v322, 16
        %v361 = vrot.slane %v359, 7
        %v362 = vshll.u32 %v322, 16
        %v364 = vor.u32 %v361, %v362
        %v365 = vrot.slane %v361, 4
        %v367 = vshrl.u32 %v323, 16
        %v369 = vrot.slane %v367, 7
        %v370 = vshll.u32 %v323, 16
        %v372 = vor.u32 %v369, %v370
        %v373 = vrot.slane %v369, 4
        %v375 = vshrl.u32 %v324, 16
        %v377 = vrot.slane %v375, 7
        %v378 = vshll.u32 %v324, 16
        %v380 = vor.u32 %v377, %v378
        %v381 = vrot.slane %v377, 4
        %v383 = vshrl.u32 %v325, 16
        %v385 = vrot.slane %v383, 7
        %v386 = vshll.u32 %v325, 16
        %v388 = vor.u32 %v385, %v386
        %v389 = vrot.slane %v385, 4
        %s406 = scalar_lea.vmem [#allocation2], 8
        %vm407 = vcmask 1043456
        %vm408 = vmand %vm407, %vm270
        %v409 = vld [vmem:[%s406] sm:$0xf]
        %v410 = vsel %vm408, %v332, %v409
        %411 = vst [vmem:[%s406] sm:$0xf] %v410
        %v412 = vld [vmem:[%s406 + $0x4] sm:$0x1]
        %v413 = vsel %vm239, %v333, %v412
        %414 = vst [vmem:[%s406 + $0x4] sm:$0x1] %v413
        %v415 = vld [vmem:[%s406 + $0x8] sm:$0xf]
        %v416 = vsel %vm408, %v340, %v415
        %417 = vst [vmem:[%s406 + $0x8] sm:$0xf] %v416
        %v418 = vld [vmem:[%s406 + $0xc] sm:$0x1]
        %v419 = vsel %vm239, %v341, %v418
        %420 = vst [vmem:[%s406 + $0xc] sm:$0x1] %v419
        %v421 = vld [vmem:[%s406 + $0x10] sm:$0xf]
        %v422 = vsel %vm408, %v348, %v421
        %423 = vst [vmem:[%s406 + $0x10] sm:$0xf] %v422
        %v424 = vld [vmem:[%s406 + $0x14] sm:$0x1]
        %v425 = vsel %vm239, %v349, %v424
        %426 = vst [vmem:[%s406 + $0x14] sm:$0x1] %v425
        %v427 = vld [vmem:[%s406 + $0x18] sm:$0xf]
        %v428 = vsel %vm408, %v356, %v427
        %429 = vst [vmem:[%s406 + $0x18] sm:$0xf] %v428
        %v430 = vld [vmem:[%s406 + $0x1c] sm:$0x1]
        %v431 = vsel %vm239, %v357, %v430
        %432 = vst [vmem:[%s406 + $0x1c] sm:$0x1] %v431
        %v433 = vld [vmem:[%s406 + $0x20] sm:$0xf]
        %v434 = vsel %vm408, %v364, %v433
        %435 = vst [vmem:[%s406 + $0x20] sm:$0xf] %v434
        %v436 = vld [vmem:[%s406 + $0x24] sm:$0x1]
        %v437 = vsel %vm239, %v365, %v436
        %438 = vst [vmem:[%s406 + $0x24] sm:$0x1] %v437
        %v439 = vld [vmem:[%s406 + $0x28] sm:$0xf]
        %v440 = vsel %vm408, %v372, %v439
        %441 = vst [vmem:[%s406 + $0x28] sm:$0xf] %v440
        %v442 = vld [vmem:[%s406 + $0x2c] sm:$0x1]
        %v443 = vsel %vm239, %v373, %v442
        %444 = vst [vmem:[%s406 + $0x2c] sm:$0x1] %v443
        %v445 = vld [vmem:[%s406 + $0x30] sm:$0xf]
        %v446 = vsel %vm408, %v380, %v445
        %447 = vst [vmem:[%s406 + $0x30] sm:$0xf] %v446
        %v448 = vld [vmem:[%s406 + $0x34] sm:$0x1]
        %v449 = vsel %vm239, %v381, %v448
        %450 = vst [vmem:[%s406 + $0x34] sm:$0x1] %v449
        %v451 = vld [vmem:[%s406 + $0x38] sm:$0xf]
        %v452 = vsel %vm408, %v388, %v451
        %453 = vst [vmem:[%s406 + $0x38] sm:$0xf] %v452
        %v454 = vld [vmem:[%s406 + $0x3c] sm:$0x1]
        %v455 = vsel %vm239, %v389, %v454
        %456 = vst [vmem:[%s406 + $0x3c] sm:$0x1] %v455
        %v457 = vld [vmem:[#allocation2] sm:$0xf]
        %v458 = vld [vmem:[#allocation2 + $0x8] sm:$0xf]
        %v459 = vld [vmem:[#allocation2 + $0x10] sm:$0xf]
        %v460 = vld [vmem:[#allocation2 + $0x18] sm:$0xf]
        %v461 = vld [vmem:[#allocation2 + $0x20] sm:$0xf]
        %v462 = vld [vmem:[#allocation2 + $0x28] sm:$0xf]
        %v463 = vld [vmem:[#allocation2 + $0x30] sm:$0xf]
        %v464 = vld [vmem:[#allocation2 + $0x38] sm:$0xf]
        %v465 = vld [vmem:[#allocation2 + $0x40] sm:$0xf]
        %v466 = vld [vmem:[#allocation2 + $0x48] sm:$0xf]
        %467 = vst [vmem:[#allocation3] sm:$0xf] %v457
        %468 = vst [vmem:[#allocation3 + $0xc] sm:$0xf] %v458
        %469 = vst [vmem:[#allocation3 + $0x18] sm:$0xf] %v459
        %470 = vst [vmem:[#allocation3 + $0x24] sm:$0xf] %v460
        %471 = vst [vmem:[#allocation3 + $0x30] sm:$0xf] %v461
        %472 = vst [vmem:[#allocation3 + $0x3c] sm:$0xf] %v462
        %473 = vst [vmem:[#allocation3 + $0x48] sm:$0xf] %v463
        %474 = vst [vmem:[#allocation3 + $0x54] sm:$0xf] %v464
        %475 = vst [vmem:[#allocation3 + $0x60] sm:$0xf] %v465
        %476 = vst [vmem:[#allocation3 + $0x6c] sm:$0xf] %v466
        %v477 = vld [vmem:[#allocation2] sm:$0xf]
        %v478 = vld [vmem:[#allocation2 + $0x4] sm:$0x1]
        %v479 = vld [vmem:[#allocation2 + $0x8] sm:$0xf]
        %v480 = vld [vmem:[#allocation2 + $0xc] sm:$0x1]
        %v481 = vld [vmem:[#allocation2 + $0x10] sm:$0xf]
        %v482 = vld [vmem:[#allocation2 + $0x14] sm:$0x1]
        %v483 = vld [vmem:[#allocation2 + $0x18] sm:$0xf]
        %v484 = vld [vmem:[#allocation2 + $0x1c] sm:$0x1]
        %v485 = vld [vmem:[#allocation2 + $0x20] sm:$0xf]
        %v486 = vld [vmem:[#allocation2 + $0x24] sm:$0x1]
        %v487 = vld [vmem:[#allocation2 + $0x28] sm:$0xf]
        %v488 = vld [vmem:[#allocation2 + $0x2c] sm:$0x1]
        %v489 = vld [vmem:[#allocation2 + $0x30] sm:$0xf]
        %v490 = vld [vmem:[#allocation2 + $0x34] sm:$0x1]
        %v491 = vld [vmem:[#allocation2 + $0x38] sm:$0xf]
        %v492 = vld [vmem:[#allocation2 + $0x3c] sm:$0x1]
        %v493 = vld [vmem:[#allocation2 + $0x40] sm:$0xf]
        %v494 = vld [vmem:[#allocation2 + $0x44] sm:$0x1]
        %v495 = vld [vmem:[#allocation2 + $0x48] sm:$0xf]
        %v496 = vld [vmem:[#allocation2 + $0x4c] sm:$0x1]
        %vm497 = vsmask.f32 3328
        %vm498 = vsmask.f32 7440
        %vm499 = vmor %vm497, %vm498
        %v501 = vshrl.u32 %v477, 16
        %v503 = vrot.slane %v501, 4
        %v504 = vshll.u32 %v477, 16
        %v506 = vrot.slane %v504, 5
        %v507 = vor.u32 %v503, %v506
        %v508 = vrot.slane %v507, 4
        %v510 = vshll.u32 %v478, 16
        %v512 = vrot.slane %v510, 5
        %v513 = vsel %vm499, %v508, %v512
        %v515 = vshrl.u32 %v479, 16
        %v517 = vrot.slane %v515, 4
        %v518 = vshll.u32 %v479, 16
        %v520 = vrot.slane %v518, 5
        %v521 = vor.u32 %v517, %v520
        %v522 = vrot.slane %v521, 4
        %v524 = vshll.u32 %v480, 16
        %v526 = vrot.slane %v524, 5
        %v527 = vsel %vm499, %v522, %v526
        %v529 = vshrl.u32 %v481, 16
        %v531 = vrot.slane %v529, 4
        %v532 = vshll.u32 %v481, 16
        %v534 = vrot.slane %v532, 5
        %v535 = vor.u32 %v531, %v534
        %v536 = vrot.slane %v535, 4
        %v538 = vshll.u32 %v482, 16
        %v540 = vrot.slane %v538, 5
        %v541 = vsel %vm499, %v536, %v540
        %v543 = vshrl.u32 %v483, 16
        %v545 = vrot.slane %v543, 4
        %v546 = vshll.u32 %v483, 16
        %v548 = vrot.slane %v546, 5
        %v549 = vor.u32 %v545, %v548
        %v550 = vrot.slane %v549, 4
        %v552 = vshll.u32 %v484, 16
        %v554 = vrot.slane %v552, 5
        %v555 = vsel %vm499, %v550, %v554
        %v557 = vshrl.u32 %v485, 16
        %v559 = vrot.slane %v557, 4
        %v560 = vshll.u32 %v485, 16
        %v562 = vrot.slane %v560, 5
        %v563 = vor.u32 %v559, %v562
        %v564 = vrot.slane %v563, 4
        %v566 = vshll.u32 %v486, 16
        %v568 = vrot.slane %v566, 5
        %v569 = vsel %vm499, %v564, %v568
        %v571 = vshrl.u32 %v487, 16
        %v573 = vrot.slane %v571, 4
        %v574 = vshll.u32 %v487, 16
        %v576 = vrot.slane %v574, 5
        %v577 = vor.u32 %v573, %v576
        %v578 = vrot.slane %v577, 4
        %v580 = vshll.u32 %v488, 16
        %v582 = vrot.slane %v580, 5
        %v583 = vsel %vm499, %v578, %v582
        %v585 = vshrl.u32 %v489, 16
        %v587 = vrot.slane %v585, 4
        %v588 = vshll.u32 %v489, 16
        %v590 = vrot.slane %v588, 5
        %v591 = vor.u32 %v587, %v590
        %v592 = vrot.slane %v591, 4
        %v594 = vshll.u32 %v490, 16
        %v596 = vrot.slane %v594, 5
        %v597 = vsel %vm499, %v592, %v596
        %v599 = vshrl.u32 %v491, 16
        %v601 = vrot.slane %v599, 4
        %v602 = vshll.u32 %v491, 16
        %v604 = vrot.slane %v602, 5
        %v605 = vor.u32 %v601, %v604
        %v606 = vrot.slane %v605, 4
        %v608 = vshll.u32 %v492, 16
        %v610 = vrot.slane %v608, 5
        %v611 = vsel %vm499, %v606, %v610
        %v613 = vshrl.u32 %v493, 16
        %v615 = vrot.slane %v613, 4
        %v616 = vshll.u32 %v493, 16
        %v618 = vrot.slane %v616, 5
        %v619 = vor.u32 %v615, %v618
        %v620 = vrot.slane %v619, 4
        %v622 = vshll.u32 %v494, 16
        %v624 = vrot.slane %v622, 5
        %v625 = vsel %vm499, %v620, %v624
        %v627 = vshrl.u32 %v495, 16
        %v629 = vrot.slane %v627, 4
        %v630 = vshll.u32 %v495, 16
        %v632 = vrot.slane %v630, 5
        %v633 = vor.u32 %v629, %v632
        %v634 = vrot.slane %v633, 4
        %v636 = vshll.u32 %v496, 16
        %v638 = vrot.slane %v636, 5
        %v639 = vsel %vm499, %v634, %v638
        %650 = vst [vmem:[#allocation3 + $0x4] sm:$0xf] %v513
        %651 = vst [vmem:[#allocation3 + $0x10] sm:$0xf] %v527
        %652 = vst [vmem:[#allocation3 + $0x1c] sm:$0xf] %v541
        %653 = vst [vmem:[#allocation3 + $0x28] sm:$0xf] %v555
        %654 = vst [vmem:[#allocation3 + $0x34] sm:$0xf] %v569
        %655 = vst [vmem:[#allocation3 + $0x40] sm:$0xf] %v583
        %656 = vst [vmem:[#allocation3 + $0x4c] sm:$0xf] %v597
        %657 = vst [vmem:[#allocation3 + $0x58] sm:$0xf] %v611
        %658 = vst [vmem:[#allocation3 + $0x64] sm:$0xf] %v625
        %659 = vst [vmem:[#allocation3 + $0x70] sm:$0xf] %v639
        %v660 = vld [vmem:[#allocation2] sm:$0xe]
        %v661 = vld [vmem:[#allocation2 + $0x4] sm:$0x1]
        %v662 = vld [vmem:[#allocation2 + $0x8] sm:$0xe]
        %v663 = vld [vmem:[#allocation2 + $0xc] sm:$0x1]
        %v664 = vld [vmem:[#allocation2 + $0x10] sm:$0xe]
        %v665 = vld [vmem:[#allocation2 + $0x14] sm:$0x1]
        %v666 = vld [vmem:[#allocation2 + $0x18] sm:$0xe]
        %v667 = vld [vmem:[#allocation2 + $0x1c] sm:$0x1]
        %v668 = vld [vmem:[#allocation2 + $0x20] sm:$0xe]
        %v669 = vld [vmem:[#allocation2 + $0x24] sm:$0x1]
        %v670 = vld [vmem:[#allocation2 + $0x28] sm:$0xe]
        %v671 = vld [vmem:[#allocation2 + $0x2c] sm:$0x1]
        %v672 = vld [vmem:[#allocation2 + $0x30] sm:$0xe]
        %v673 = vld [vmem:[#allocation2 + $0x34] sm:$0x1]
        %v674 = vld [vmem:[#allocation2 + $0x38] sm:$0xe]
        %v675 = vld [vmem:[#allocation2 + $0x3c] sm:$0x1]
        %v676 = vld [vmem:[#allocation2 + $0x40] sm:$0xe]
        %v677 = vld [vmem:[#allocation2 + $0x44] sm:$0x1]
        %v678 = vld [vmem:[#allocation2 + $0x48] sm:$0xe]
        %v679 = vld [vmem:[#allocation2 + $0x4c] sm:$0x1]
        %vm700 = vcmask 1042432
        %vm701 = vcmask 1046532
        %vm702 = vmor %vm700, %vm701
        %v703 = vrot.slane %v660, 5
        %v704 = vrot.slane %v703, 4
        %v705 = vrot.slane %v661, 5
        %v706 = vsel %vm702, %v704, %v705
        %v707 = vrot.slane %v662, 5
        %v708 = vrot.slane %v707, 4
        %v709 = vrot.slane %v663, 5
        %v710 = vsel %vm702, %v708, %v709
        %v711 = vrot.slane %v664, 5
        %v712 = vrot.slane %v711, 4
        %v713 = vrot.slane %v665, 5
        %v714 = vsel %vm702, %v712, %v713
        %v715 = vrot.slane %v666, 5
        %v716 = vrot.slane %v715, 4
        %v717 = vrot.slane %v667, 5
        %v718 = vsel %vm702, %v716, %v717
        %v719 = vrot.slane %v668, 5
        %v720 = vrot.slane %v719, 4
        %v721 = vrot.slane %v669, 5
        %v722 = vsel %vm702, %v720, %v721
        %v723 = vrot.slane %v670, 5
        %v724 = vrot.slane %v723, 4
        %v725 = vrot.slane %v671, 5
        %v726 = vsel %vm702, %v724, %v725
        %v727 = vrot.slane %v672, 5
        %v728 = vrot.slane %v727, 4
        %v729 = vrot.slane %v673, 5
        %v730 = vsel %vm702, %v728, %v729
        %v731 = vrot.slane %v674, 5
        %v732 = vrot.slane %v731, 4
        %v733 = vrot.slane %v675, 5
        %v734 = vsel %vm702, %v732, %v733
        %v735 = vrot.slane %v676, 5
        %v736 = vrot.slane %v735, 4
        %v737 = vrot.slane %v677, 5
        %v738 = vsel %vm702, %v736, %v737
        %v739 = vrot.slane %v678, 5
        %v740 = vrot.slane %v739, 4
        %v741 = vrot.slane %v679, 5
        %v742 = vsel %vm702, %v740, %v741
        %753 = vst [vmem:[#allocation3 + $0x8] sm:$0xf] %v706
        %754 = vst [vmem:[#allocation3 + $0x14] sm:$0xf] %v710
        %755 = vst [vmem:[#allocation3 + $0x20] sm:$0xf] %v714
        %756 = vst [vmem:[#allocation3 + $0x2c] sm:$0xf] %v718
        %757 = vst [vmem:[#allocation3 + $0x38] sm:$0xf] %v722
        %758 = vst [vmem:[#allocation3 + $0x44] sm:$0xf] %v726
        %759 = vst [vmem:[#allocation3 + $0x50] sm:$0xf] %v730
        %760 = vst [vmem:[#allocation3 + $0x5c] sm:$0xf] %v734
        %761 = vst [vmem:[#allocation3 + $0x68] sm:$0xf] %v738
        %762 = vst [vmem:[#allocation3 + $0x74] sm:$0xf] %v742
        %v763 = vld [vmem:[#allocation3] sm:$0xff]
        %v764 = vld [vmem:[#allocation3 + $0x8] sm:$0xf]
        %v765 = vld [vmem:[#allocation3 + $0xc] sm:$0xff]
        %v766 = vld [vmem:[#allocation3 + $0x14] sm:$0xf]
        %v767 = vld [vmem:[#allocation3 + $0x18] sm:$0xff]
        %v768 = vld [vmem:[#allocation3 + $0x20] sm:$0xf]
        %v769 = vld [vmem:[#allocation3 + $0x24] sm:$0xff]
        %v770 = vld [vmem:[#allocation3 + $0x2c] sm:$0xf]
        %v771 = vld [vmem:[#allocation3 + $0x30] sm:$0xff]
        %v772 = vld [vmem:[#allocation3 + $0x38] sm:$0xf]
        %v773 = vld [vmem:[#allocation3 + $0x3c] sm:$0xff]
        %v774 = vld [vmem:[#allocation3 + $0x44] sm:$0xf]
        %v775 = vld [vmem:[#allocation3 + $0x48] sm:$0xff]
        %v776 = vld [vmem:[#allocation3 + $0x50] sm:$0xf]
        %v777 = vld [vmem:[#allocation3 + $0x54] sm:$0xff]
        %v778 = vld [vmem:[#allocation3 + $0x5c] sm:$0xf]
        %v779 = vld [vmem:[#allocation7] sm:$0xf]
        %v780 = vld [vmem:[#allocation7 + $0x4] sm:$0xf]
        %v781 = vld [vmem:[#allocation7 + $0x8] sm:$0xf]
        %v782 = vld [vmem:[#allocation7 + $0xc] sm:$0xf]
        %v783 = vld [vmem:[#allocation7 + $0x10] sm:$0xf]
        %v784 = vld [vmem:[#allocation7 + $0x14] sm:$0xf]
        %v785 = vld [vmem:[#allocation7 + $0x18] sm:$0xf]
        %v786 = vld [vmem:[#allocation7 + $0x1c] sm:$0xf]
        %v787 = vld [vmem:[#allocation7 + $0x20] sm:$0xf]
        %v788 = vld [vmem:[#allocation7 + $0x24] sm:$0xf]
        %v789 = vld [vmem:[#allocation7 + $0x28] sm:$0xf]
        %v790 = vld [vmem:[#allocation7 + $0x2c] sm:$0xf]
        %v791 = vld [vmem:[#allocation7 + $0x30] sm:$0xf]
        %v792 = vld [vmem:[#allocation7 + $0x34] sm:$0xf]
        %v793 = vld [vmem:[#allocation7 + $0x38] sm:$0xf]
        %v794 = vld [vmem:[#allocation7 + $0x3c] sm:$0xf]
        %v795 = vld [vmem:[#allocation7 + $0x40] sm:$0xf]
        %v796 = vld [vmem:[#allocation7 + $0x44] sm:$0xf]
        %v797 = vld [vmem:[#allocation7 + $0x48] sm:$0xf]
        %v798 = vld [vmem:[#allocation7 + $0x4c] sm:$0xf]
        %v799 = vld [vmem:[#allocation7 + $0x50] sm:$0xf]
        %v800 = vld [vmem:[#allocation7 + $0x54] sm:$0xf]
        %v801 = vld [vmem:[#allocation7 + $0x58] sm:$0xf]
        %v802 = vld [vmem:[#allocation7 + $0x5c] sm:$0xf]
        %v803 = vld [vmem:[#allocation7 + $0x60] sm:$0xf]
        %v804 = vld [vmem:[#allocation7 + $0x64] sm:$0xf]
        %v805 = vld [vmem:[#allocation7 + $0x68] sm:$0xf]
        %v806 = vld [vmem:[#allocation7 + $0x6c] sm:$0xf]
        %v807 = vld [vmem:[#allocation7 + $0x70] sm:$0xf]
        %v808 = vld [vmem:[#allocation7 + $0x74] sm:$0xf]
        %v809 = vld [vmem:[#allocation7 + $0x78] sm:$0xf]
        %v810 = vld [vmem:[#allocation7 + $0x7c] sm:$0xf]
        %v811 = vld [vmem:[#allocation7 + $0x80] sm:$0xf]
        %v812 = vld [vmem:[#allocation7 + $0x84] sm:$0xf]
        %v813 = vld [vmem:[#allocation7 + $0x88] sm:$0xf]
        %v814 = vld [vmem:[#allocation7 + $0x8c] sm:$0xf]
        %v815 = vld [vmem:[#allocation7 + $0x90] sm:$0xf]
        %v816 = vld [vmem:[#allocation7 + $0x94] sm:$0xf]
        %v817 = vld [vmem:[#allocation7 + $0x98] sm:$0xf]
        %v818 = vld [vmem:[#allocation7 + $0x9c] sm:$0xf]
        %v819 = vld [vmem:[#allocation7 + $0xa0] sm:$0xf]
        %v820 = vld [vmem:[#allocation7 + $0xa4] sm:$0xf]
        %v821 = vld [vmem:[#allocation7 + $0xa8] sm:$0xf]
        %v822 = vld [vmem:[#allocation7 + $0xac] sm:$0xf]
        %v823 = vld [vmem:[#allocation7 + $0xb0] sm:$0xf]
        %v824 = vld [vmem:[#allocation7 + $0xb4] sm:$0xf]
        %v825 = vld [vmem:[#allocation7 + $0xb8] sm:$0xf]
        %v826 = vld [vmem:[#allocation7 + $0xbc] sm:$0xf]
        %v827 = vld [vmem:[#allocation3 + $0x60] sm:$0xff]
        %v828 = vld [vmem:[#allocation3 + $0x68] sm:$0xf]
        %s829 = scalar_lea.vmem [#allocation7], 192
        %v830 = vld [vmem:[%s829] sm:$0xf]
        %v831 = vld [vmem:[%s829 + $0x4] sm:$0xf]
        %v832 = vld [vmem:[%s829 + $0x8] sm:$0xf]
        %v833 = vld [vmem:[%s829 + $0xc] sm:$0xf]
        %v834 = vld [vmem:[%s829 + $0x10] sm:$0xf]
        %v835 = vld [vmem:[%s829 + $0x14] sm:$0xf]
        %v836 = vld [vmem:[%s829 + $0x18] sm:$0xf]
        %v837 = vld [vmem:[%s829 + $0x1c] sm:$0xf]
        %v838 = vld [vmem:[%s829 + $0x20] sm:$0xf]
        %v839 = vld [vmem:[%s829 + $0x24] sm:$0xf]
        %v840 = vld [vmem:[%s829 + $0x28] sm:$0xf]
        %v841 = vld [vmem:[%s829 + $0x2c] sm:$0xf]
        %v842 = vld [vmem:[%s829 + $0x30] sm:$0xf]
        %v843 = vld [vmem:[%s829 + $0x34] sm:$0xf]
        %v844 = vld [vmem:[%s829 + $0x38] sm:$0xf]
        %v845 = vld [vmem:[%s829 + $0x3c] sm:$0xf]
        %v846 = vld [vmem:[%s829 + $0x40] sm:$0xf]
        %v847 = vld [vmem:[%s829 + $0x44] sm:$0xf]
        %v848 = vld [vmem:[%s829 + $0x48] sm:$0xf]
        %v849 = vld [vmem:[%s829 + $0x4c] sm:$0xf]
        %v850 = vld [vmem:[%s829 + $0x50] sm:$0xf]
        %v851 = vld [vmem:[%s829 + $0x54] sm:$0xf]
        %v852 = vld [vmem:[%s829 + $0x58] sm:$0xf]
        %v853 = vld [vmem:[%s829 + $0x5c] sm:$0xf]
        %v854 = vld [vmem:[%s829 + $0x60] sm:$0xf]
        %v855 = vld [vmem:[%s829 + $0x64] sm:$0xf]
        %v856 = vld [vmem:[%s829 + $0x68] sm:$0xf]
        %v857 = vld [vmem:[%s829 + $0x6c] sm:$0xf]
        %v858 = vld [vmem:[%s829 + $0x70] sm:$0xf]
        %v859 = vld [vmem:[%s829 + $0x74] sm:$0xf]
        %v860 = vld [vmem:[%s829 + $0x78] sm:$0xf]
        %v861 = vld [vmem:[%s829 + $0x7c] sm:$0xf]
        %v862 = vld [vmem:[%s829 + $0x80] sm:$0xf]
        %v863 = vld [vmem:[%s829 + $0x84] sm:$0xf]
        %v864 = vld [vmem:[%s829 + $0x88] sm:$0xf]
        %v865 = vld [vmem:[%s829 + $0x8c] sm:$0xf]
        %v866 = vld [vmem:[%s829 + $0x90] sm:$0xf]
        %v867 = vld [vmem:[%s829 + $0x94] sm:$0xf]
        %v868 = vld [vmem:[%s829 + $0x98] sm:$0xf]
        %v869 = vld [vmem:[%s829 + $0x9c] sm:$0xf]
        %v870 = vld [vmem:[%s829 + $0xa0] sm:$0xf]
        %v871 = vld [vmem:[%s829 + $0xa4] sm:$0xf]
        %v872 = vld [vmem:[%s829 + $0xa8] sm:$0xf]
        %v873 = vld [vmem:[%s829 + $0xac] sm:$0xf]
        %v874 = vld [vmem:[%s829 + $0xb0] sm:$0xf]
        %v875 = vld [vmem:[%s829 + $0xb4] sm:$0xf]
        %v876 = vld [vmem:[%s829 + $0xb8] sm:$0xf]
        %v877 = vld [vmem:[%s829 + $0xbc] sm:$0xf]
        %v894 = vunpack.c.l.b16 %v765
        %v895 = vunpack.c.h.b16 %v765
        %v896 = vunpack.c.l.b16 %v766
        %v897 = vunpack.c.l.b16 %v767
        %v898 = vunpack.c.h.b16 %v767
        %v899 = vunpack.c.l.b16 %v768
        %v900 = vunpack.c.l.b16 %v769
        %v901 = vunpack.c.h.b16 %v769
        %v902 = vunpack.c.l.b16 %v770
        %v903 = vunpack.c.l.b16 %v771
        %v904 = vunpack.c.h.b16 %v771
        %v905 = vunpack.c.l.b16 %v772
        %v906 = vunpack.c.l.b16 %v773
        %v907 = vunpack.c.h.b16 %v773
        %v908 = vunpack.c.l.b16 %v774
        %v909 = vunpack.c.l.b16 %v775
        %v910 = vunpack.c.h.b16 %v775
        %v911 = vunpack.c.l.b16 %v776
        %v912 = vunpack.c.l.b16 %v777
        %v913 = vunpack.c.h.b16 %v777
        %v914 = vunpack.c.l.b16 %v778
        %v915 = vunpack.c.l.b16 %v827
        %v916 = vunpack.c.h.b16 %v827
        %v917 = vunpack.c.l.b16 %v828
        %v918 = vpack.c.b16 %v897, %v894
        %v919 = vpack.c.b16 %v898, %v895
        %v920 = vpack.c.b16 %v899, %v896
        %v921 = vpack.c.b16 %v903, %v900
        %v922 = vpack.c.b16 %v904, %v901
        %v923 = vpack.c.b16 %v905, %v902
        %v924 = vpack.c.b16 %v909, %v906
        %v925 = vpack.c.b16 %v910, %v907
        %v926 = vpack.c.b16 %v911, %v908
        %v927 = vpack.c.b16 %v915, %v912
        %v928 = vpack.c.b16 %v916, %v913
        %v929 = vpack.c.b16 %v917, %v914
        %v990 = vunpack.c.l.b16 %v830
        %v991 = vunpack.c.l.b16 %v831
        %v992 = vunpack.c.l.b16 %v832
        %v993 = vunpack.c.l.b16 %v833
        %v994 = vunpack.c.l.b16 %v834
        %v995 = vunpack.c.l.b16 %v835
        %v996 = vunpack.c.l.b16 %v836
        %v997 = vunpack.c.l.b16 %v837
        %v998 = vunpack.c.l.b16 %v838
        %v999 = vunpack.c.l.b16 %v839
        %v1000 = vunpack.c.l.b16 %v840
        %v1001 = vunpack.c.l.b16 %v841
        %v1002 = vunpack.c.l.b16 %v842
        %v1003 = vunpack.c.l.b16 %v843
        %v1004 = vunpack.c.l.b16 %v844
        %v1005 = vunpack.c.l.b16 %v845
        %v1006 = vunpack.c.l.b16 %v846
        %v1007 = vunpack.c.l.b16 %v847
        %v1008 = vunpack.c.l.b16 %v848
        %v1009 = vunpack.c.l.b16 %v849
        %v1010 = vunpack.c.l.b16 %v850
        %v1011 = vunpack.c.l.b16 %v851
        %v1012 = vunpack.c.l.b16 %v852
        %v1013 = vunpack.c.l.b16 %v853
        %v1014 = vunpack.c.l.b16 %v854
        %v1015 = vunpack.c.l.b16 %v855
        %v1016 = vunpack.c.l.b16 %v856
        %v1017 = vunpack.c.l.b16 %v857
        %v1018 = vunpack.c.l.b16 %v858
        %v1019 = vunpack.c.l.b16 %v859
        %v1020 = vunpack.c.l.b16 %v860
        %v1021 = vunpack.c.l.b16 %v861
        %v1022 = vunpack.c.l.b16 %v862
        %v1023 = vunpack.c.l.b16 %v863
        %v1024 = vunpack.c.l.b16 %v864
        %v1025 = vunpack.c.l.b16 %v865
        %v1026 = vunpack.c.l.b16 %v866
        %v1027 = vunpack.c.l.b16 %v867
        %v1028 = vunpack.c.l.b16 %v868
        %v1029 = vunpack.c.l.b16 %v869
        %v1030 = vunpack.c.l.b16 %v870
        %v1031 = vunpack.c.l.b16 %v871
        %v1032 = vunpack.c.l.b16 %v872
        %v1033 = vunpack.c.l.b16 %v873
        %v1034 = vunpack.c.l.b16 %v874
        %v1035 = vunpack.c.l.b16 %v875
        %v1036 = vunpack.c.l.b16 %v876
        %v1037 = vunpack.c.l.b16 %v877
        %v1038 = vpack.c.b16 %v991, %v990
        %v1039 = vpack.c.b16 %v993, %v992
        %v1040 = vpack.c.b16 %v995, %v994
        %v1041 = vpack.c.b16 %v997, %v996
        %v1042 = vpack.c.b16 %v999, %v998
        %v1043 = vpack.c.b16 %v1001, %v1000
        %v1044 = vpack.c.b16 %v1003, %v1002
        %v1045 = vpack.c.b16 %v1005, %v1004
        %v1046 = vpack.c.b16 %v1007, %v1006
        %v1047 = vpack.c.b16 %v1009, %v1008
        %v1048 = vpack.c.b16 %v1011, %v1010
        %v1049 = vpack.c.b16 %v1013, %v1012
        %v1050 = vpack.c.b16 %v1015, %v1014
        %v1051 = vpack.c.b16 %v1017, %v1016
        %v1052 = vpack.c.b16 %v1019, %v1018
        %v1053 = vpack.c.b16 %v1021, %v1020
        %v1054 = vpack.c.b16 %v1023, %v1022
        %v1055 = vpack.c.b16 %v1025, %v1024
        %v1056 = vpack.c.b16 %v1027, %v1026
        %v1057 = vpack.c.b16 %v1029, %v1028
        %v1058 = vpack.c.b16 %v1031, %v1030
        %v1059 = vpack.c.b16 %v1033, %v1032
        %v1060 = vpack.c.b16 %v1035, %v1034
        %v1061 = vpack.c.b16 %v1037, %v1036
        %1086 = vmatprep.subr.bf16.mxu0 0
        %1087 = vmatpush1.bf16.msra.mxu0 %v1045
        %1088 = vmatprep.subr.bf16.mxu0 0
        %1089 = vmatpush1.bf16.msra.mxu0 %v1044
        %1090 = vmatprep.subr.bf16.mxu0 0
        %1091 = vmatpush1.bf16.msra.mxu0 %v1043
        %1092 = vmatprep.subr.bf16.mxu0 0
        %1093 = vmatpush1.bf16.msra.mxu0 %v1042
        %1094 = vmatprep.subr.bf16.mxu0 0
        %1095 = vmatpush1.bf16.msra.mxu0 %v1041
        %1096 = vmatprep.subr.bf16.mxu0 0
        %1097 = vmatpush1.bf16.msra.mxu0 %v1040
        %1098 = vmatprep.subr.bf16.mxu0 0
        %1099 = vmatpush1.bf16.msra.mxu0 %v1039
        %1100 = vmatprep.subr.bf16.mxu0 0
        %1101 = vmatpush1.bf16.msra.mxu0 %v1038
        %1102 = vmatprep.subr.bf16.mxu0 0
        %1103 = vmatpush2.bf16.msra.mxu0 %v1053
        %1104 = vmatprep.subr.bf16.mxu0 0
        %1105 = vmatpush2.bf16.msra.mxu0 %v1052
        %1106 = vmatprep.subr.bf16.mxu0 0
        %1107 = vmatpush2.bf16.msra.mxu0 %v1051
        %1108 = vmatprep.subr.bf16.mxu0 0
        %1109 = vmatpush2.bf16.msra.mxu0 %v1050
        %1110 = vmatprep.subr.bf16.mxu0 0
        %1111 = vmatpush2.bf16.msra.mxu0 %v1049
        %1112 = vmatprep.subr.bf16.mxu0 0
        %1113 = vmatpush2.bf16.msra.mxu0 %v1048
        %1114 = vmatprep.subr.bf16.mxu0 0
        %1115 = vmatpush2.bf16.msra.mxu0 %v1047
        %1116 = vmatprep.subr.bf16.mxu0 0
        %1117 = vmatpush2.bf16.msra.mxu0 %v1046
        %1118 = vmatprep.mubr.bf16.mxu0 %v919
        %1119 = vmatmul.mubr.bf16.gmra.mxu0 %v918
        %v1120 = vpop.f32.mrf.mxu0
        %v1121 = vadd.f32 0.0, %v1120
        %v1122 = vpop.f32.mrf.mxu0
        %v1123 = vpop.f32.mrf.mxu0
        %v1124 = vadd.f32 0.0, %v1123
        %v1125 = vpop.f32.mrf.mxu0
        %1126 = vmatprep.mubr.bf16.mxu0 %v922
        %1127 = vmatmul.mubr.bf16.gmra.mxu0 %v921
        %v1128 = vpop.f32.mrf.mxu0
        %v1129 = vadd.f32 0.0, %v1128
        %v1130 = vpop.f32.mrf.mxu0
        %v1131 = vpop.f32.mrf.mxu0
        %v1132 = vadd.f32 0.0, %v1131
        %v1133 = vpop.f32.mrf.mxu0
        %1134 = vmatprep.mubr.bf16.mxu0 %v925
        %1135 = vmatmul.mubr.bf16.gmra.mxu0 %v924
        %v1136 = vpop.f32.mrf.mxu0
        %v1137 = vadd.f32 0.0, %v1136
        %v1138 = vpop.f32.mrf.mxu0
        %v1139 = vpop.f32.mrf.mxu0
        %v1140 = vadd.f32 0.0, %v1139
        %v1141 = vpop.f32.mrf.mxu0
        %1142 = vmatprep.mubr.bf16.mxu0 %v928
        %1143 = vmatmul.mubr.bf16.gmra.mxu0 %v927
        %v1144 = vpop.f32.mrf.mxu0
        %v1145 = vadd.f32 0.0, %v1144
        %v1146 = vpop.f32.mrf.mxu0
        %v1147 = vpop.f32.mrf.mxu0
        %v1148 = vadd.f32 0.0, %v1147
        %v1149 = vpop.f32.mrf.mxu0
        %1150 = vdwg.mxu0
        %1151 = vmatprep.subr.bf16.mxu0 0
        %1152 = vmatpush1.bf16.msra.mxu0 %v1061
        %1153 = vmatprep.subr.bf16.mxu0 0
        %1154 = vmatpush1.bf16.msra.mxu0 %v1060
        %1155 = vmatprep.subr.bf16.mxu0 0
        %1156 = vmatpush1.bf16.msra.mxu0 %v1059
        %1157 = vmatprep.subr.bf16.mxu0 0
        %1158 = vmatpush1.bf16.msra.mxu0 %v1058
        %1159 = vmatprep.subr.bf16.mxu0 0
        %1160 = vmatpush1.bf16.msra.mxu0 %v1057
        %1161 = vmatprep.subr.bf16.mxu0 0
        %1162 = vmatpush1.bf16.msra.mxu0 %v1056
        %1163 = vmatprep.subr.bf16.mxu0 0
        %1164 = vmatpush1.bf16.msra.mxu0 %v1055
        %1165 = vmatprep.subr.bf16.mxu0 0
        %1166 = vmatpush1.bf16.msra.mxu0 %v1054
        %1167 = vmatprep.subr.bf16.mxu0 0
        %1168 = vmatpush2.bf16.msra.mxu0 0
        %1169 = vmatprep.subr.bf16.mxu0 0
        %1170 = vmatpush2.bf16.msra.mxu0 0
        %1171 = vmatprep.subr.bf16.mxu0 0
        %1172 = vmatpush2.bf16.msra.mxu0 0
        %1173 = vmatprep.subr.bf16.mxu0 0
        %1174 = vmatpush2.bf16.msra.mxu0 0
        %1175 = vmatprep.subr.bf16.mxu0 0
        %1176 = vmatpush2.bf16.msra.mxu0 0
        %1177 = vmatprep.subr.bf16.mxu0 0
        %1178 = vmatpush2.bf16.msra.mxu0 0
        %1179 = vmatprep.subr.bf16.mxu0 0
        %1180 = vmatpush2.bf16.msra.mxu0 0
        %1181 = vmatprep.subr.bf16.mxu0 0
        %1182 = vmatpush2.bf16.msra.mxu0 0
        %1183 = vmatprep.mubr.bf16.mxu0 0
        %1184 = vmatmul.mubr.bf16.gmra.mxu0 %v920
        %v1185 = vpop.f32.mrf.mxu0
        %v1186 = vadd.f32 %v1121, %v1185
        %v1187 = vpop.f32.mrf.mxu0
        %v1188 = vpop.f32.mrf.mxu0
        %v1189 = vadd.f32 %v1124, %v1188
        %v1190 = vpop.f32.mrf.mxu0
        %1191 = vmatprep.mubr.bf16.mxu0 0
        %1192 = vmatmul.mubr.bf16.gmra.mxu0 %v923
        %v1193 = vpop.f32.mrf.mxu0
        %v1194 = vadd.f32 %v1129, %v1193
        %v1195 = vpop.f32.mrf.mxu0
        %v1196 = vpop.f32.mrf.mxu0
        %v1197 = vadd.f32 %v1132, %v1196
        %v1198 = vpop.f32.mrf.mxu0
        %1199 = vmatprep.mubr.bf16.mxu0 0
        %1200 = vmatmul.mubr.bf16.gmra.mxu0 %v926
        %v1201 = vpop.f32.mrf.mxu0
        %v1202 = vadd.f32 %v1137, %v1201
        %v1203 = vpop.f32.mrf.mxu0
        %v1204 = vpop.f32.mrf.mxu0
        %v1205 = vadd.f32 %v1140, %v1204
        %v1206 = vpop.f32.mrf.mxu0
        %1207 = vmatprep.mubr.bf16.mxu0 0
        %1208 = vmatmul.mubr.bf16.gmra.mxu0 %v929
        %v1209 = vpop.f32.mrf.mxu0
        %v1210 = vadd.f32 %v1145, %v1209
        %v1211 = vpop.f32.mrf.mxu0
        %v1212 = vpop.f32.mrf.mxu0
        %v1213 = vadd.f32 %v1148, %v1212
        %v1214 = vpop.f32.mrf.mxu0
        %1215 = vdwg.mxu0
        %v1218 = vunpack.c.l.b16 %v763
        %v1219 = vunpack.c.h.b16 %v763
        %v1220 = vunpack.c.l.b16 %v764
        %v1221 = vpack.c.b16 %v894, %v1218
        %v1222 = vpack.c.b16 %v895, %v1219
        %v1223 = vpack.c.b16 %v896, %v1220
        %v1224 = vpack.c.b16 %v900, %v897
        %v1225 = vpack.c.b16 %v901, %v898
        %v1226 = vpack.c.b16 %v902, %v899
        %v1227 = vpack.c.b16 %v906, %v903
        %v1228 = vpack.c.b16 %v907, %v904
        %v1229 = vpack.c.b16 %v908, %v905
        %v1230 = vpack.c.b16 %v912, %v909
        %v1231 = vpack.c.b16 %v913, %v910
        %v1232 = vpack.c.b16 %v914, %v911
        %v1293 = vunpack.c.l.b16 %v779
        %v1294 = vunpack.c.l.b16 %v780
        %v1295 = vunpack.c.l.b16 %v781
        %v1296 = vunpack.c.l.b16 %v782
        %v1297 = vunpack.c.l.b16 %v783
        %v1298 = vunpack.c.l.b16 %v784
        %v1299 = vunpack.c.l.b16 %v785
        %v1300 = vunpack.c.l.b16 %v786
        %v1301 = vunpack.c.l.b16 %v787
        %v1302 = vunpack.c.l.b16 %v788
        %v1303 = vunpack.c.l.b16 %v789
        %v1304 = vunpack.c.l.b16 %v790
        %v1305 = vunpack.c.l.b16 %v791
        %v1306 = vunpack.c.l.b16 %v792
        %v1307 = vunpack.c.l.b16 %v793
        %v1308 = vunpack.c.l.b16 %v794
        %v1309 = vunpack.c.l.b16 %v795
        %v1310 = vunpack.c.l.b16 %v796
        %v1311 = vunpack.c.l.b16 %v797
        %v1312 = vunpack.c.l.b16 %v798
        %v1313 = vunpack.c.l.b16 %v799
        %v1314 = vunpack.c.l.b16 %v800
        %v1315 = vunpack.c.l.b16 %v801
        %v1316 = vunpack.c.l.b16 %v802
        %v1317 = vunpack.c.l.b16 %v803
        %v1318 = vunpack.c.l.b16 %v804
        %v1319 = vunpack.c.l.b16 %v805
        %v1320 = vunpack.c.l.b16 %v806
        %v1321 = vunpack.c.l.b16 %v807
        %v1322 = vunpack.c.l.b16 %v808
        %v1323 = vunpack.c.l.b16 %v809
        %v1324 = vunpack.c.l.b16 %v810
        %v1325 = vunpack.c.l.b16 %v811
        %v1326 = vunpack.c.l.b16 %v812
        %v1327 = vunpack.c.l.b16 %v813
        %v1328 = vunpack.c.l.b16 %v814
        %v1329 = vunpack.c.l.b16 %v815
        %v1330 = vunpack.c.l.b16 %v816
        %v1331 = vunpack.c.l.b16 %v817
        %v1332 = vunpack.c.l.b16 %v818
        %v1333 = vunpack.c.l.b16 %v819
        %v1334 = vunpack.c.l.b16 %v820
        %v1335 = vunpack.c.l.b16 %v821
        %v1336 = vunpack.c.l.b16 %v822
        %v1337 = vunpack.c.l.b16 %v823
        %v1338 = vunpack.c.l.b16 %v824
        %v1339 = vunpack.c.l.b16 %v825
        %v1340 = vunpack.c.l.b16 %v826
        %v1341 = vpack.c.b16 %v1294, %v1293
        %v1342 = vpack.c.b16 %v1296, %v1295
        %v1343 = vpack.c.b16 %v1298, %v1297
        %v1344 = vpack.c.b16 %v1300, %v1299
        %v1345 = vpack.c.b16 %v1302, %v1301
        %v1346 = vpack.c.b16 %v1304, %v1303
        %v1347 = vpack.c.b16 %v1306, %v1305
        %v1348 = vpack.c.b16 %v1308, %v1307
        %v1349 = vpack.c.b16 %v1310, %v1309
        %v1350 = vpack.c.b16 %v1312, %v1311
        %v1351 = vpack.c.b16 %v1314, %v1313
        %v1352 = vpack.c.b16 %v1316, %v1315
        %v1353 = vpack.c.b16 %v1318, %v1317
        %v1354 = vpack.c.b16 %v1320, %v1319
        %v1355 = vpack.c.b16 %v1322, %v1321
        %v1356 = vpack.c.b16 %v1324, %v1323
        %v1357 = vpack.c.b16 %v1326, %v1325
        %v1358 = vpack.c.b16 %v1328, %v1327
        %v1359 = vpack.c.b16 %v1330, %v1329
        %v1360 = vpack.c.b16 %v1332, %v1331
        %v1361 = vpack.c.b16 %v1334, %v1333
        %v1362 = vpack.c.b16 %v1336, %v1335
        %v1363 = vpack.c.b16 %v1338, %v1337
        %v1364 = vpack.c.b16 %v1340, %v1339
        %1389 = vmatprep.subr.bf16.mxu0 0
        %1390 = vmatpush1.bf16.msra.mxu0 %v1348
        %1391 = vmatprep.subr.bf16.mxu0 0
        %1392 = vmatpush1.bf16.msra.mxu0 %v1347
        %1393 = vmatprep.subr.bf16.mxu0 0
        %1394 = vmatpush1.bf16.msra.mxu0 %v1346
        %1395 = vmatprep.subr.bf16.mxu0 0
        %1396 = vmatpush1.bf16.msra.mxu0 %v1345
        %1397 = vmatprep.subr.bf16.mxu0 0
        %1398 = vmatpush1.bf16.msra.mxu0 %v1344
        %1399 = vmatprep.subr.bf16.mxu0 0
        %1400 = vmatpush1.bf16.msra.mxu0 %v1343
        %1401 = vmatprep.subr.bf16.mxu0 0
        %1402 = vmatpush1.bf16.msra.mxu0 %v1342
        %1403 = vmatprep.subr.bf16.mxu0 0
        %1404 = vmatpush1.bf16.msra.mxu0 %v1341
        %1405 = vmatprep.subr.bf16.mxu0 0
        %1406 = vmatpush2.bf16.msra.mxu0 %v1356
        %1407 = vmatprep.subr.bf16.mxu0 0
        %1408 = vmatpush2.bf16.msra.mxu0 %v1355
        %1409 = vmatprep.subr.bf16.mxu0 0
        %1410 = vmatpush2.bf16.msra.mxu0 %v1354
        %1411 = vmatprep.subr.bf16.mxu0 0
        %1412 = vmatpush2.bf16.msra.mxu0 %v1353
        %1413 = vmatprep.subr.bf16.mxu0 0
        %1414 = vmatpush2.bf16.msra.mxu0 %v1352
        %1415 = vmatprep.subr.bf16.mxu0 0
        %1416 = vmatpush2.bf16.msra.mxu0 %v1351
        %1417 = vmatprep.subr.bf16.mxu0 0
        %1418 = vmatpush2.bf16.msra.mxu0 %v1350
        %1419 = vmatprep.subr.bf16.mxu0 0
        %1420 = vmatpush2.bf16.msra.mxu0 %v1349
        %1421 = vmatprep.mubr.bf16.mxu0 %v1222
        %1422 = vmatmul.mubr.bf16.gmra.mxu0 %v1221
        %v1423 = vpop.f32.mrf.mxu0
        %v1424 = vadd.f32 %v1186, %v1423
        %v1425 = vpop.f32.mrf.mxu0
        %v1426 = vpop.f32.mrf.mxu0
        %v1427 = vadd.f32 %v1189, %v1426
        %v1428 = vpop.f32.mrf.mxu0
        %1429 = vmatprep.mubr.bf16.mxu0 %v1225
        %1430 = vmatmul.mubr.bf16.gmra.mxu0 %v1224
        %v1431 = vpop.f32.mrf.mxu0
        %v1432 = vadd.f32 %v1194, %v1431
        %v1433 = vpop.f32.mrf.mxu0
        %v1434 = vpop.f32.mrf.mxu0
        %v1435 = vadd.f32 %v1197, %v1434
        %v1436 = vpop.f32.mrf.mxu0
        %1437 = vmatprep.mubr.bf16.mxu0 %v1228
        %1438 = vmatmul.mubr.bf16.gmra.mxu0 %v1227
        %v1439 = vpop.f32.mrf.mxu0
        %v1440 = vadd.f32 %v1202, %v1439
        %v1441 = vpop.f32.mrf.mxu0
        %v1442 = vpop.f32.mrf.mxu0
        %v1443 = vadd.f32 %v1205, %v1442
        %v1444 = vpop.f32.mrf.mxu0
        %1445 = vmatprep.mubr.bf16.mxu0 %v1231
        %1446 = vmatmul.mubr.bf16.gmra.mxu0 %v1230
        %v1447 = vpop.f32.mrf.mxu0
        %v1448 = vadd.f32 %v1210, %v1447
        %v1449 = vpop.f32.mrf.mxu0
        %v1450 = vpop.f32.mrf.mxu0
        %v1451 = vadd.f32 %v1213, %v1450
        %v1452 = vpop.f32.mrf.mxu0
        %1453 = vdwg.mxu0
        %1454 = vmatprep.subr.bf16.mxu0 0
        %1455 = vmatpush1.bf16.msra.mxu0 %v1364
        %1456 = vmatprep.subr.bf16.mxu0 0
        %1457 = vmatpush1.bf16.msra.mxu0 %v1363
        %1458 = vmatprep.subr.bf16.mxu0 0
        %1459 = vmatpush1.bf16.msra.mxu0 %v1362
        %1460 = vmatprep.subr.bf16.mxu0 0
        %1461 = vmatpush1.bf16.msra.mxu0 %v1361
        %1462 = vmatprep.subr.bf16.mxu0 0
        %1463 = vmatpush1.bf16.msra.mxu0 %v1360
        %1464 = vmatprep.subr.bf16.mxu0 0
        %1465 = vmatpush1.bf16.msra.mxu0 %v1359
        %1466 = vmatprep.subr.bf16.mxu0 0
        %1467 = vmatpush1.bf16.msra.mxu0 %v1358
        %1468 = vmatprep.subr.bf16.mxu0 0
        %1469 = vmatpush1.bf16.msra.mxu0 %v1357
        %1470 = vmatprep.subr.bf16.mxu0 0
        %1471 = vmatpush2.bf16.msra.mxu0 0
        %1472 = vmatprep.subr.bf16.mxu0 0
        %1473 = vmatpush2.bf16.msra.mxu0 0
        %1474 = vmatprep.subr.bf16.mxu0 0
        %1475 = vmatpush2.bf16.msra.mxu0 0
        %1476 = vmatprep.subr.bf16.mxu0 0
        %1477 = vmatpush2.bf16.msra.mxu0 0
        %1478 = vmatprep.subr.bf16.mxu0 0
        %1479 = vmatpush2.bf16.msra.mxu0 0
        %1480 = vmatprep.subr.bf16.mxu0 0
        %1481 = vmatpush2.bf16.msra.mxu0 0
        %1482 = vmatprep.subr.bf16.mxu0 0
        %1483 = vmatpush2.bf16.msra.mxu0 0
        %1484 = vmatprep.subr.bf16.mxu0 0
        %1485 = vmatpush2.bf16.msra.mxu0 0
        %1486 = vmatprep.mubr.bf16.mxu0 0
        %1487 = vmatmul.mubr.bf16.gmra.mxu0 %v1223
        %v1488 = vpop.f32.mrf.mxu0
        %v1489 = vadd.f32 %v1424, %v1488
        %v1490 = vpop.f32.mrf.mxu0
        %v1491 = vpop.f32.mrf.mxu0
        %v1492 = vadd.f32 %v1427, %v1491
        %v1493 = vpop.f32.mrf.mxu0
        %1494 = vmatprep.mubr.bf16.mxu0 0
        %1495 = vmatmul.mubr.bf16.gmra.mxu0 %v1226
        %v1496 = vpop.f32.mrf.mxu0
        %v1497 = vadd.f32 %v1432, %v1496
        %v1498 = vpop.f32.mrf.mxu0
        %v1499 = vpop.f32.mrf.mxu0
        %v1500 = vadd.f32 %v1435, %v1499
        %v1501 = vpop.f32.mrf.mxu0
        %1502 = vmatprep.mubr.bf16.mxu0 0
        %1503 = vmatmul.mubr.bf16.gmra.mxu0 %v1229
        %v1504 = vpop.f32.mrf.mxu0
        %v1505 = vadd.f32 %v1440, %v1504
        %v1506 = vpop.f32.mrf.mxu0
        %v1507 = vpop.f32.mrf.mxu0
        %v1508 = vadd.f32 %v1443, %v1507
        %v1509 = vpop.f32.mrf.mxu0
        %1510 = vmatprep.mubr.bf16.mxu0 0
        %1511 = vmatmul.mubr.bf16.gmra.mxu0 %v1232
        %v1512 = vpop.f32.mrf.mxu0
        %v1513 = vadd.f32 %v1448, %v1512
        %v1514 = vpop.f32.mrf.mxu0
        %v1515 = vpop.f32.mrf.mxu0
        %v1516 = vadd.f32 %v1451, %v1515
        %v1517 = vpop.f32.mrf.mxu0
        %1518 = vdwg.mxu0
        %v1519 = vld [vmem:[#allocation3 + $0x18] sm:$0xff]
        %v1520 = vld [vmem:[#allocation3 + $0x20] sm:$0xf]
        %v1521 = vld [vmem:[#allocation3 + $0x24] sm:$0xff]
        %v1522 = vld [vmem:[#allocation3 + $0x2c] sm:$0xf]
        %v1523 = vld [vmem:[#allocation3 + $0x30] sm:$0xff]
        %v1524 = vld [vmem:[#allocation3 + $0x38] sm:$0xf]
        %v1525 = vld [vmem:[#allocation3 + $0x3c] sm:$0xff]
        %v1526 = vld [vmem:[#allocation3 + $0x44] sm:$0xf]
        %v1527 = vld [vmem:[#allocation3 + $0x48] sm:$0xff]
        %v1528 = vld [vmem:[#allocation3 + $0x50] sm:$0xf]
        %v1529 = vld [vmem:[#allocation3 + $0x54] sm:$0xff]
        %v1530 = vld [vmem:[#allocation3 + $0x5c] sm:$0xf]
        %v1531 = vld [vmem:[#allocation3 + $0x60] sm:$0xff]
        %v1532 = vld [vmem:[#allocation3 + $0x68] sm:$0xf]
        %v1533 = vld [vmem:[#allocation3 + $0x6c] sm:$0xff]
        %v1534 = vld [vmem:[#allocation3 + $0x74] sm:$0xf]
        %s1535 = scalar_lea.vmem [#allocation7], 384
        %v1536 = vld [vmem:[%s1535] sm:$0xf]
        %v1537 = vld [vmem:[%s1535 + $0x4] sm:$0xf]
        %v1538 = vld [vmem:[%s1535 + $0x8] sm:$0xf]
        %v1539 = vld [vmem:[%s1535 + $0xc] sm:$0xf]
        %v1540 = vld [vmem:[%s1535 + $0x10] sm:$0xf]
        %v1541 = vld [vmem:[%s1535 + $0x14] sm:$0xf]
        %v1542 = vld [vmem:[%s1535 + $0x18] sm:$0xf]
        %v1543 = vld [vmem:[%s1535 + $0x1c] sm:$0xf]
        %v1544 = vld [vmem:[%s1535 + $0x20] sm:$0xf]
        %v1545 = vld [vmem:[%s1535 + $0x24] sm:$0xf]
        %v1546 = vld [vmem:[%s1535 + $0x28] sm:$0xf]
        %v1547 = vld [vmem:[%s1535 + $0x2c] sm:$0xf]
        %v1548 = vld [vmem:[%s1535 + $0x30] sm:$0xf]
        %v1549 = vld [vmem:[%s1535 + $0x34] sm:$0xf]
        %v1550 = vld [vmem:[%s1535 + $0x38] sm:$0xf]
        %v1551 = vld [vmem:[%s1535 + $0x3c] sm:$0xf]
        %v1552 = vld [vmem:[%s1535 + $0x40] sm:$0xf]
        %v1553 = vld [vmem:[%s1535 + $0x44] sm:$0xf]
        %v1554 = vld [vmem:[%s1535 + $0x48] sm:$0xf]
        %v1555 = vld [vmem:[%s1535 + $0x4c] sm:$0xf]
        %v1556 = vld [vmem:[%s1535 + $0x50] sm:$0xf]
        %v1557 = vld [vmem:[%s1535 + $0x54] sm:$0xf]
        %v1558 = vld [vmem:[%s1535 + $0x58] sm:$0xf]
        %v1559 = vld [vmem:[%s1535 + $0x5c] sm:$0xf]
        %v1560 = vld [vmem:[%s1535 + $0x60] sm:$0xf]
        %v1561 = vld [vmem:[%s1535 + $0x64] sm:$0xf]
        %v1562 = vld [vmem:[%s1535 + $0x68] sm:$0xf]
        %v1563 = vld [vmem:[%s1535 + $0x6c] sm:$0xf]
        %v1564 = vld [vmem:[%s1535 + $0x70] sm:$0xf]
        %v1565 = vld [vmem:[%s1535 + $0x74] sm:$0xf]
        %v1566 = vld [vmem:[%s1535 + $0x78] sm:$0xf]
        %v1567 = vld [vmem:[%s1535 + $0x7c] sm:$0xf]
        %v1568 = vld [vmem:[%s1535 + $0x80] sm:$0xf]
        %v1569 = vld [vmem:[%s1535 + $0x84] sm:$0xf]
        %v1570 = vld [vmem:[%s1535 + $0x88] sm:$0xf]
        %v1571 = vld [vmem:[%s1535 + $0x8c] sm:$0xf]
        %v1572 = vld [vmem:[%s1535 + $0x90] sm:$0xf]
        %v1573 = vld [vmem:[%s1535 + $0x94] sm:$0xf]
        %v1574 = vld [vmem:[%s1535 + $0x98] sm:$0xf]
        %v1575 = vld [vmem:[%s1535 + $0x9c] sm:$0xf]
        %v1576 = vld [vmem:[%s1535 + $0xa0] sm:$0xf]
        %v1577 = vld [vmem:[%s1535 + $0xa4] sm:$0xf]
        %v1578 = vld [vmem:[%s1535 + $0xa8] sm:$0xf]
        %v1579 = vld [vmem:[%s1535 + $0xac] sm:$0xf]
        %v1580 = vld [vmem:[%s1535 + $0xb0] sm:$0xf]
        %v1581 = vld [vmem:[%s1535 + $0xb4] sm:$0xf]
        %v1582 = vld [vmem:[%s1535 + $0xb8] sm:$0xf]
        %v1583 = vld [vmem:[%s1535 + $0xbc] sm:$0xf]
        %v1600 = vunpack.c.l.b16 %v1519
        %v1601 = vunpack.c.h.b16 %v1519
        %v1602 = vunpack.c.l.b16 %v1520
        %v1603 = vunpack.c.l.b16 %v1521
        %v1604 = vunpack.c.h.b16 %v1521
        %v1605 = vunpack.c.l.b16 %v1522
        %v1606 = vunpack.c.l.b16 %v1523
        %v1607 = vunpack.c.h.b16 %v1523
        %v1608 = vunpack.c.l.b16 %v1524
        %v1609 = vunpack.c.l.b16 %v1525
        %v1610 = vunpack.c.h.b16 %v1525
        %v1611 = vunpack.c.l.b16 %v1526
        %v1612 = vunpack.c.l.b16 %v1527
        %v1613 = vunpack.c.h.b16 %v1527
        %v1614 = vunpack.c.l.b16 %v1528
        %v1615 = vunpack.c.l.b16 %v1529
        %v1616 = vunpack.c.h.b16 %v1529
        %v1617 = vunpack.c.l.b16 %v1530
        %v1618 = vunpack.c.l.b16 %v1531
        %v1619 = vunpack.c.h.b16 %v1531
        %v1620 = vunpack.c.l.b16 %v1532
        %v1621 = vunpack.c.l.b16 %v1533
        %v1622 = vunpack.c.h.b16 %v1533
        %v1623 = vunpack.c.l.b16 %v1534
        %v1624 = vpack.c.b16 %v1603, %v1600
        %v1625 = vpack.c.b16 %v1604, %v1601
        %v1626 = vpack.c.b16 %v1605, %v1602
        %v1627 = vpack.c.b16 %v1609, %v1606
        %v1628 = vpack.c.b16 %v1610, %v1607
        %v1629 = vpack.c.b16 %v1611, %v1608
        %v1630 = vpack.c.b16 %v1615, %v1612
        %v1631 = vpack.c.b16 %v1616, %v1613
        %v1632 = vpack.c.b16 %v1617, %v1614
        %v1633 = vpack.c.b16 %v1621, %v1618
        %v1634 = vpack.c.b16 %v1622, %v1619
        %v1635 = vpack.c.b16 %v1623, %v1620
        %v1696 = vunpack.c.l.b16 %v1536
        %v1697 = vunpack.c.l.b16 %v1537
        %v1698 = vunpack.c.l.b16 %v1538
        %v1699 = vunpack.c.l.b16 %v1539
        %v1700 = vunpack.c.l.b16 %v1540
        %v1701 = vunpack.c.l.b16 %v1541
        %v1702 = vunpack.c.l.b16 %v1542
        %v1703 = vunpack.c.l.b16 %v1543
        %v1704 = vunpack.c.l.b16 %v1544
        %v1705 = vunpack.c.l.b16 %v1545
        %v1706 = vunpack.c.l.b16 %v1546
        %v1707 = vunpack.c.l.b16 %v1547
        %v1708 = vunpack.c.l.b16 %v1548
        %v1709 = vunpack.c.l.b16 %v1549
        %v1710 = vunpack.c.l.b16 %v1550
        %v1711 = vunpack.c.l.b16 %v1551
        %v1712 = vunpack.c.l.b16 %v1552
        %v1713 = vunpack.c.l.b16 %v1553
        %v1714 = vunpack.c.l.b16 %v1554
        %v1715 = vunpack.c.l.b16 %v1555
        %v1716 = vunpack.c.l.b16 %v1556
        %v1717 = vunpack.c.l.b16 %v1557
        %v1718 = vunpack.c.l.b16 %v1558
        %v1719 = vunpack.c.l.b16 %v1559
        %v1720 = vunpack.c.l.b16 %v1560
        %v1721 = vunpack.c.l.b16 %v1561
        %v1722 = vunpack.c.l.b16 %v1562
        %v1723 = vunpack.c.l.b16 %v1563
        %v1724 = vunpack.c.l.b16 %v1564
        %v1725 = vunpack.c.l.b16 %v1565
        %v1726 = vunpack.c.l.b16 %v1566
        %v1727 = vunpack.c.l.b16 %v1567
        %v1728 = vunpack.c.l.b16 %v1568
        %v1729 = vunpack.c.l.b16 %v1569
        %v1730 = vunpack.c.l.b16 %v1570
        %v1731 = vunpack.c.l.b16 %v1571
        %v1732 = vunpack.c.l.b16 %v1572
        %v1733 = vunpack.c.l.b16 %v1573
        %v1734 = vunpack.c.l.b16 %v1574
        %v1735 = vunpack.c.l.b16 %v1575
        %v1736 = vunpack.c.l.b16 %v1576
        %v1737 = vunpack.c.l.b16 %v1577
        %v1738 = vunpack.c.l.b16 %v1578
        %v1739 = vunpack.c.l.b16 %v1579
        %v1740 = vunpack.c.l.b16 %v1580
        %v1741 = vunpack.c.l.b16 %v1581
        %v1742 = vunpack.c.l.b16 %v1582
        %v1743 = vunpack.c.l.b16 %v1583
        %v1744 = vpack.c.b16 %v1697, %v1696
        %v1745 = vpack.c.b16 %v1699, %v1698
        %v1746 = vpack.c.b16 %v1701, %v1700
        %v1747 = vpack.c.b16 %v1703, %v1702
        %v1748 = vpack.c.b16 %v1705, %v1704
        %v1749 = vpack.c.b16 %v1707, %v1706
        %v1750 = vpack.c.b16 %v1709, %v1708
        %v1751 = vpack.c.b16 %v1711, %v1710
        %v1752 = vpack.c.b16 %v1713, %v1712
        %v1753 = vpack.c.b16 %v1715, %v1714
        %v1754 = vpack.c.b16 %v1717, %v1716
        %v1755 = vpack.c.b16 %v1719, %v1718
        %v1756 = vpack.c.b16 %v1721, %v1720
        %v1757 = vpack.c.b16 %v1723, %v1722
        %v1758 = vpack.c.b16 %v1725, %v1724
        %v1759 = vpack.c.b16 %v1727, %v1726
        %v1760 = vpack.c.b16 %v1729, %v1728
        %v1761 = vpack.c.b16 %v1731, %v1730
        %v1762 = vpack.c.b16 %v1733, %v1732
        %v1763 = vpack.c.b16 %v1735, %v1734
        %v1764 = vpack.c.b16 %v1737, %v1736
        %v1765 = vpack.c.b16 %v1739, %v1738
        %v1766 = vpack.c.b16 %v1741, %v1740
        %v1767 = vpack.c.b16 %v1743, %v1742
        %1792 = vmatprep.subr.bf16.mxu0 0
        %1793 = vmatpush1.bf16.msra.mxu0 %v1751
        %1794 = vmatprep.subr.bf16.mxu0 0
        %1795 = vmatpush1.bf16.msra.mxu0 %v1750
        %1796 = vmatprep.subr.bf16.mxu0 0
        %1797 = vmatpush1.bf16.msra.mxu0 %v1749
        %1798 = vmatprep.subr.bf16.mxu0 0
        %1799 = vmatpush1.bf16.msra.mxu0 %v1748
        %1800 = vmatprep.subr.bf16.mxu0 0
        %1801 = vmatpush1.bf16.msra.mxu0 %v1747
        %1802 = vmatprep.subr.bf16.mxu0 0
        %1803 = vmatpush1.bf16.msra.mxu0 %v1746
        %1804 = vmatprep.subr.bf16.mxu0 0
        %1805 = vmatpush1.bf16.msra.mxu0 %v1745
        %1806 = vmatprep.subr.bf16.mxu0 0
        %1807 = vmatpush1.bf16.msra.mxu0 %v1744
        %1808 = vmatprep.subr.bf16.mxu0 0
        %1809 = vmatpush2.bf16.msra.mxu0 %v1759
        %1810 = vmatprep.subr.bf16.mxu0 0
        %1811 = vmatpush2.bf16.msra.mxu0 %v1758
        %1812 = vmatprep.subr.bf16.mxu0 0
        %1813 = vmatpush2.bf16.msra.mxu0 %v1757
        %1814 = vmatprep.subr.bf16.mxu0 0
        %1815 = vmatpush2.bf16.msra.mxu0 %v1756
        %1816 = vmatprep.subr.bf16.mxu0 0
        %1817 = vmatpush2.bf16.msra.mxu0 %v1755
        %1818 = vmatprep.subr.bf16.mxu0 0
        %1819 = vmatpush2.bf16.msra.mxu0 %v1754
        %1820 = vmatprep.subr.bf16.mxu0 0
        %1821 = vmatpush2.bf16.msra.mxu0 %v1753
        %1822 = vmatprep.subr.bf16.mxu0 0
        %1823 = vmatpush2.bf16.msra.mxu0 %v1752
        %1824 = vmatprep.mubr.bf16.mxu0 %v1625
        %1825 = vmatmul.mubr.bf16.gmra.mxu0 %v1624
        %v1826 = vpop.f32.mrf.mxu0
        %v1827 = vadd.f32 0.0, %v1826
        %v1828 = vpop.f32.mrf.mxu0
        %v1829 = vpop.f32.mrf.mxu0
        %v1830 = vadd.f32 0.0, %v1829
        %v1831 = vpop.f32.mrf.mxu0
        %1832 = vmatprep.mubr.bf16.mxu0 %v1628
        %1833 = vmatmul.mubr.bf16.gmra.mxu0 %v1627
        %v1834 = vpop.f32.mrf.mxu0
        %v1835 = vadd.f32 0.0, %v1834
        %v1836 = vpop.f32.mrf.mxu0
        %v1837 = vpop.f32.mrf.mxu0
        %v1838 = vadd.f32 0.0, %v1837
        %v1839 = vpop.f32.mrf.mxu0
        %1840 = vmatprep.mubr.bf16.mxu0 %v1631
        %1841 = vmatmul.mubr.bf16.gmra.mxu0 %v1630
        %v1842 = vpop.f32.mrf.mxu0
        %v1843 = vadd.f32 0.0, %v1842
        %v1844 = vpop.f32.mrf.mxu0
        %v1845 = vpop.f32.mrf.mxu0
        %v1846 = vadd.f32 0.0, %v1845
        %v1847 = vpop.f32.mrf.mxu0
        %1848 = vmatprep.mubr.bf16.mxu0 %v1634
        %1849 = vmatmul.mubr.bf16.gmra.mxu0 %v1633
        %v1850 = vpop.f32.mrf.mxu0
        %v1851 = vadd.f32 0.0, %v1850
        %v1852 = vpop.f32.mrf.mxu0
        %v1853 = vpop.f32.mrf.mxu0
        %v1854 = vadd.f32 0.0, %v1853
        %v1855 = vpop.f32.mrf.mxu0
        %1856 = vdwg.mxu0
        %1857 = vmatprep.subr.bf16.mxu0 0
        %1858 = vmatpush1.bf16.msra.mxu0 %v1767
        %1859 = vmatprep.subr.bf16.mxu0 0
        %1860 = vmatpush1.bf16.msra.mxu0 %v1766
        %1861 = vmatprep.subr.bf16.mxu0 0
        %1862 = vmatpush1.bf16.msra.mxu0 %v1765
        %1863 = vmatprep.subr.bf16.mxu0 0
        %1864 = vmatpush1.bf16.msra.mxu0 %v1764
        %1865 = vmatprep.subr.bf16.mxu0 0
        %1866 = vmatpush1.bf16.msra.mxu0 %v1763
        %1867 = vmatprep.subr.bf16.mxu0 0
        %1868 = vmatpush1.bf16.msra.mxu0 %v1762
        %1869 = vmatprep.subr.bf16.mxu0 0
        %1870 = vmatpush1.bf16.msra.mxu0 %v1761
        %1871 = vmatprep.subr.bf16.mxu0 0
        %1872 = vmatpush1.bf16.msra.mxu0 %v1760
        %1873 = vmatprep.subr.bf16.mxu0 0
        %1874 = vmatpush2.bf16.msra.mxu0 0
        %1875 = vmatprep.subr.bf16.mxu0 0
        %1876 = vmatpush2.bf16.msra.mxu0 0
        %1877 = vmatprep.subr.bf16.mxu0 0
        %1878 = vmatpush2.bf16.msra.mxu0 0
        %1879 = vmatprep.subr.bf16.mxu0 0
        %1880 = vmatpush2.bf16.msra.mxu0 0
        %1881 = vmatprep.subr.bf16.mxu0 0
        %1882 = vmatpush2.bf16.msra.mxu0 0
        %1883 = vmatprep.subr.bf16.mxu0 0
        %1884 = vmatpush2.bf16.msra.mxu0 0
        %1885 = vmatprep.subr.bf16.mxu0 0
        %1886 = vmatpush2.bf16.msra.mxu0 0
        %1887 = vmatprep.subr.bf16.mxu0 0
        %1888 = vmatpush2.bf16.msra.mxu0 0
        %1889 = vmatprep.mubr.bf16.mxu0 0
        %1890 = vmatmul.mubr.bf16.gmra.mxu0 %v1626
        %v1891 = vpop.f32.mrf.mxu0
        %v1892 = vadd.f32 %v1827, %v1891
        %v1893 = vpop.f32.mrf.mxu0
        %v1894 = vpop.f32.mrf.mxu0
        %v1895 = vadd.f32 %v1830, %v1894
        %v1896 = vpop.f32.mrf.mxu0
        %1897 = vmatprep.mubr.bf16.mxu0 0
        %1898 = vmatmul.mubr.bf16.gmra.mxu0 %v1629
        %v1899 = vpop.f32.mrf.mxu0
        %v1900 = vadd.f32 %v1835, %v1899
        %v1901 = vpop.f32.mrf.mxu0
        %v1902 = vpop.f32.mrf.mxu0
        %v1903 = vadd.f32 %v1838, %v1902
        %v1904 = vpop.f32.mrf.mxu0
        %1905 = vmatprep.mubr.bf16.mxu0 0
        %1906 = vmatmul.mubr.bf16.gmra.mxu0 %v1632
        %v1907 = vpop.f32.mrf.mxu0
        %v1908 = vadd.f32 %v1843, %v1907
        %v1909 = vpop.f32.mrf.mxu0
        %v1910 = vpop.f32.mrf.mxu0
        %v1911 = vadd.f32 %v1846, %v1910
        %v1912 = vpop.f32.mrf.mxu0
        %1913 = vmatprep.mubr.bf16.mxu0 0
        %1914 = vmatmul.mubr.bf16.gmra.mxu0 %v1635
        %v1915 = vpop.f32.mrf.mxu0
        %v1916 = vadd.f32 %v1851, %v1915
        %v1917 = vpop.f32.mrf.mxu0
        %v1918 = vpop.f32.mrf.mxu0
        %v1919 = vadd.f32 %v1854, %v1918
        %v1920 = vpop.f32.mrf.mxu0
        %1921 = vdwg.mxu0
        %v1922 = vadd.f32 %v1489, %v1892
        %v1923 = vadd.f32 %v1492, %v1895
        %v1924 = vadd.f32 %v1497, %v1900
        %v1925 = vadd.f32 %v1500, %v1903
        %v1926 = vadd.f32 %v1505, %v1908
        %v1927 = vadd.f32 %v1508, %v1911
        %v1928 = vadd.f32 %v1513, %v1916
        %v1929 = vadd.f32 %v1516, %v1919
        %1930 = vst [vmem:[%s207] sm:$0xff] %v1922
        %1931 = vst [vmem:[%s207 + $0x8] sm:$0xff] %v1923
        %1932 = vst [vmem:[%s207 + $0x10] sm:$0xff] %v1924
        %1933 = vst [vmem:[%s207 + $0x18] sm:$0xff] %v1925
        %1934 = vst [vmem:[%s207 + $0x20] sm:$0xff] %v1926
        %1935 = vst [vmem:[%s207 + $0x28] sm:$0xff] %v1927
        %1936 = vst [vmem:[%s207 + $0x30] sm:$0xff] %v1928
        %1937 = vst [vmem:[%s207 + $0x38] sm:$0xff] %v1929
        %v1938 = vadd.f32 %v1922, %v1923
        %v1939 = vadd.f32 %v1938, %v1924
        %v1940 = vadd.f32 %v1939, %v1925
        %v1941 = vadd.f32 %v1940, %v1926
        %v1942 = vadd.f32 %v1941, %v1927
        %v1943 = vadd.f32 %v1942, %v1928
        %v1944 = vadd.f32 %v1943, %v1929
        %v1945 = vrot.slane %v1944, 4
        %v1946 = vadd.f32 %v1944, %v1945
        %v1947 = vrot.slane %v1946, 2
        %v1948 = vadd.f32 %v1946, %v1947
        %v1949 = vrot.slane %v1948, 1
        %v1950 = vadd.f32 %v1948, %v1949
        %v1951 = vmul.f32 %v1922, %v1922
        %v1952 = vmul.f32 %v1923, %v1923
        %v1953 = vmul.f32 %v1924, %v1924
        %v1954 = vmul.f32 %v1925, %v1925
        %v1955 = vmul.f32 %v1926, %v1926
        %v1956 = vmul.f32 %v1927, %v1927
        %v1957 = vmul.f32 %v1928, %v1928
        %v1958 = vmul.f32 %v1929, %v1929
        %v1959 = vadd.f32 %v1951, %v1952
        %v1960 = vadd.f32 %v1959, %v1953
        %v1961 = vadd.f32 %v1960, %v1954
        %v1962 = vadd.f32 %v1961, %v1955
        %v1963 = vadd.f32 %v1962, %v1956
        %v1964 = vadd.f32 %v1963, %v1957
        %v1965 = vadd.f32 %v1964, %v1958
        %v1966 = vrot.slane %v1965, 4
        %v1967 = vadd.f32 %v1965, %v1966
        %v1968 = vrot.slane %v1967, 2
        %v1969 = vadd.f32 %v1967, %v1968
        %v1970 = vrot.slane %v1969, 1
        %v1971 = vadd.f32 %v1969, %v1970
        %v1972 = vlaneseq
        %v1973 = vshrl.u32 %v1972, 7
        %vm1974 = vcmp.eq.s32.totalorder %v1973, 0
        %v1975 = vsel %vm1974, %v1950, %v1971
        %1976 = vst [vmem:[%s214] sm:$0x3] %v1975
        %s1977 = sand.u32 %s80, 1
        %s1978 = scalar_lea.sflag [#allocation6], %s1977
        %s1979 = sand.u32 %s80, 1
        %s1980 = smul.addr %s1979, 64
        %s1981 = scalar_lea.vmem [#allocation9], %s1980
        %s1982 = sand.u32 %s106, 1
        %s1983 = scalar_lea.sflag [#allocation11], %s1982
        %s1984 = sand.u32 %s106, 1
        %s1985 = smul.addr %s1984, 2
        %s1986 = scalar_lea.vmem [#allocation10], %s1985
        // Predicated region
        $region37: #{tpu_custom_call.1} parent=27 // pred_check
          %p1987 = pneg %p90
        $region38: #{tpu_custom_call.1} parent=27 // pred_check_branch
          %1989 = sbr.rel (%p1987) target = $region40
        $region39: #{tpu_custom_call.1} parent=27 // pred_region
          %s1991 = ssub.s32 1024, 1024
          %1992 = vsyncadd %s1978, %s1991
          %s1993 = smul.addr %s25, 8
          %s1994 = smul.addr %s1993, 128
          %s1995 = scalar_lea.hbm %s2, %s1994
          %s1996 = sshll.u32 %s1981, 4
          %s1997 = int_to_ptr.vmem [resolvable:$true] %s1996
          %2002 = dma.vmem_to_hbm [thread:$0]  %s1997, 1024, %s1995, %s1978, 128, 128, 8
        $region40: #{tpu_custom_call.1} parent=27 // pred_fallthru
          _
        // Predicated region
        $region41: #{tpu_custom_call.1} parent=27 // pred_check
          %p2003 = pneg %p116
        $region42: #{tpu_custom_call.1} parent=27 // pred_check_branch
          %2005 = sbr.rel (%p2003) target = $region44
        $region43: #{tpu_custom_call.1} parent=27 // pred_region
          %s2007 = ssub.s32 32, 32
          %2008 = vsyncadd %s1983, %s2007
          %s2009 = smul.addr %s25, 32
          %s2010 = scalar_lea.hbm %s3, %s2009
          %s2012 = sshll.u32 %s1986, 4
          %s2013 = int_to_ptr.vmem [resolvable:$true] %s2012
          %2015 = dma.vmem_to_hbm [thread:$0]  %s2013, 32, %s2010, %s1983
        $region44: #{tpu_custom_call.1} parent=27 // pred_fallthru
          _
      $region28: #{tpu_custom_call.1} parent=5 // pred_fallthru
        _
      %p2016 = scmp.le.s32.totalorder 2, %s20
      // Predicated region
      $region45: #{tpu_custom_call.1} parent=5 // pred_check
        %p2017 = pneg %p2016
      $region46: #{tpu_custom_call.1} parent=5 // pred_check_branch
        %2019 = sbr.rel (%p2017) target = $region48
      $region47: #{tpu_custom_call.1} parent=5 // pred_region
        %s2020 = ssub.s32 %s20, 2
        // Predicated region
        $region49: #{tpu_custom_call.1} parent=47 // pred_check
          %p2021 = pneg %p96
        $region50: #{tpu_custom_call.1} parent=47 // pred_check_branch
          %2023 = sbr.rel (%p2021) target = $region52
        $region51: #{tpu_custom_call.1} parent=47 // pred_region
          %s2024 = sand.u32 %s81, 1
          %s2025 = scalar_lea.sflag [#allocation6], %s2024
          %s2026 = sand.u32 %s81, 1
          %s2027 = smul.addr %s2026, 64
          %s2028 = scalar_lea.vmem [#allocation9], %s2027
          %2029 = dma.done %s2025, 1024
        $region52: #{tpu_custom_call.1} parent=47 // pred_fallthru
          _
        // Predicated region
        $region53: #{tpu_custom_call.1} parent=47 // pred_check
          %p2030 = pneg %p122
        $region54: #{tpu_custom_call.1} parent=47 // pred_check_branch
          %2032 = sbr.rel (%p2030) target = $region56
        $region55: #{tpu_custom_call.1} parent=47 // pred_region
          %s2033 = sand.u32 %s107, 1
          %s2034 = scalar_lea.sflag [#allocation11], %s2033
          %s2035 = sand.u32 %s107, 1
          %s2036 = smul.addr %s2035, 2
          %s2037 = scalar_lea.vmem [#allocation10], %s2036
          %2038 = dma.done %s2034, 32
        $region56: #{tpu_custom_call.1} parent=47 // pred_fallthru
          _
      $region48: #{tpu_custom_call.1} parent=5 // pred_fallthru
        _
    $region6: #{tpu_custom_call.1} parent=1 // loop_footer
      %s24 = sadd.s32 1, %s20
    $region7: #{tpu_custom_call.1} parent=1 // loop_footer_branch
      %19 = sbr.rel target = $region3
    $region8: #{tpu_custom_call.1} parent=1 // loop_exit
      _
    %2039 = vsyncpa [#allocation5], 1
    %s2040 = scalar_lea.sflag [#allocation5], 1
    %2041 = vsyncpa %s2040, 1
    %2042 = vsyncpa [#allocation8], 1
    %2043 = vsyncpa [#allocation6], 1
    %s2044 = scalar_lea.sflag [#allocation6], 1
    %2045 = vsyncpa %s2044, 1
    %2046 = vsyncpa [#allocation11], 1
    %s2047 = scalar_lea.sflag [#allocation11], 1
    %2048 = vsyncpa %s2047, 1

</llo_original>
